<compile_context>
chip_gen: v7x
topology: tpu7x:2x2x1
jax: 0.10.0
libtpu: 0.0.40
codegen_flags: <defaults>
</compile_context>

<pallas_src>
import functools

import jax
import jax.numpy as jnp
from jax.experimental import pallas as pl
from jax.experimental.pallas import tpu as pltpu


# ----------------------------- Pallas kernels ------------------------------

def _conv_bn_silu_kernel(x_ref, w_ref, b_ref, o_ref, *, kh, kw, hout, wout):
    """k x k 'same' conv (stride 1) + folded BN + SiLU for one batch element.

    x_ref: (Hp, Wp, Cin)  padded activation (Hp = hout + kh - 1)
    w_ref: (kh*kw, Cin, Cout)  bf16, BN scale already folded in
    b_ref: (1, Cout)  f32 folded BN bias
    o_ref: (hout*wout, Cout)
    """
    cin = x_ref.shape[-1]
    cout = o_ref.shape[-1]
    m = hout * wout

    xp = x_ref[...]                                    # f32 (Hp, Wp, Cin)
    acc = jnp.zeros((m, cout), jnp.float32)
    # in-kernel "im2col": kh*kw shifted views, each a single MXU matmul
    for dy in range(kh):
        for dx in range(kw):
            xs = xp[dy:dy + hout, dx:dx + wout, :].reshape(m, cin)
            acc = acc + jnp.dot(xs.astype(jnp.bfloat16), w_ref[dy * kw + dx],
                                preferred_element_type=jnp.float32)
    y = acc + b_ref[...]                               # folded BN bias
    y = y * jax.nn.sigmoid(y)                          # SiLU (f32, VPU/EUP)
    o_ref[...] = y.astype(o_ref.dtype)


def _transformer_stack_kernel(x_ref, ln1g_ref, ln1b_ref, wqkv_ref, wo_ref, bo_ref,
                              ln2g_ref, ln2b_ref, w1_ref, b1_ref, w2_ref, b2_ref,
                              o_ref, *, heads, dim_head):
    """One pre-norm transformer layer (MHSA + SiLU-MLP, residuals) applied to the
    whole (P, N, D) token slab of one batch element.  grid = (B, depth); the
    output block is resident across the depth axis, so layer l reads layer l-1's
    result straight from VMEM.

    x_ref/o_ref: (P, N, D) f32.  Weights (bf16): wqkv (D, 3*inner) with the
    1/sqrt(dim_head) scale pre-folded into the Q columns, wo (inner, D),
    w1 (D, mlp), w2 (mlp, D).  LN params / biases are f32 (1, *).
    """
    P, N, D = x_ref.shape
    M = P * N
    inner = heads * dim_head

    # first layer for this batch element: seed the resident slab with the input
    @pl.when(pl.program_id(1) == 0)
    def _():
        o_ref[...] = x_ref[...]

    x = o_ref[...].reshape(M, D).astype(jnp.float32)   # (M, D) rows for big matmuls

    # ---- PreNorm(LayerNorm) + multi-head self-attention ----
    mu = jnp.mean(x, axis=-1, keepdims=True)
    var = jnp.mean(jnp.square(x - mu), axis=-1, keepdims=True)
    y = (x - mu) * jax.lax.rsqrt(var + 1e-5) * ln1g_ref[...] + ln1b_ref[...]

    qkv = jnp.dot(y.astype(jnp.bfloat16), wqkv_ref[...],
                  preferred_element_type=jnp.float32)  # (M, 3*inner), Q pre-scaled
    q = qkv[:, :inner].reshape(P, N, inner)
    k = qkv[:, inner:2 * inner].reshape(P, N, inner)
    v = qkv[:, 2 * inner:].reshape(P, N, inner)

    head_outs = []
    for h in range(heads):                             # short static loop; each dot is
        sl = slice(h * dim_head, (h + 1) * dim_head)   # batched over all P positions
        qh = q[:, :, sl].astype(jnp.bfloat16)
        kh = k[:, :, sl].astype(jnp.bfloat16)
        vh = v[:, :, sl].astype(jnp.bfloat16)
        s = jnp.einsum('pnd,pmd->pnm', qh, kh,
                       preferred_element_type=jnp.float32)        # (P, N, N)
        s = s - jnp.max(s, axis=-1, keepdims=True)
        e = jnp.exp(s)
        attn = e * pl.reciprocal(jnp.sum(e, axis=-1, keepdims=True), approx=True)
        head_outs.append(jnp.einsum('pnm,pmd->pnd', attn.astype(jnp.bfloat16), vh,
                                    preferred_element_type=jnp.float32))
    attn_cat = jnp.concatenate(head_outs, axis=-1).reshape(M, inner)
    # single merged output projection (instead of per-head (N, dh) @ (dh, D))
    x = x + jnp.dot(attn_cat.astype(jnp.bfloat16), wo_ref[...],
                    preferred_element_type=jnp.float32) + bo_ref[...]

    # ---- PreNorm(LayerNorm) + feed-forward (SiLU MLP) ----
    mu2 = jnp.mean(x, axis=-1, keepdims=True)
    var2 = jnp.mean(jnp.square(x - mu2), axis=-1, keepdims=True)
    z = (x - mu2) * jax.lax.rsqrt(var2 + 1e-5) * ln2g_ref[...] + ln2b_ref[...]
    h1 = jnp.dot(z.astype(jnp.bfloat16), w1_ref[...],
                 preferred_element_type=jnp.float32) + b1_ref[...]
    h1 = h1 * jax.nn.sigmoid(h1)
    ff = jnp.dot(h1.astype(jnp.bfloat16), w2_ref[...],
                 preferred_element_type=jnp.float32) + b2_ref[...]
    x = x + ff

    o_ref[...] = x.reshape(P, N, D).astype(o_ref.dtype)


# ------------------------------ wrappers ------------------------------------

def _conv_bn_silu(x_nhwc, p):
    """k x k conv (stride 1, pad (k-1)//2) + folded BN + SiLU, one grid step per batch."""
    w, scale, bias = p['w'], p['scale'], p['bias']       # w: (kh, kw, Cin, Cout)
    B, H, W, Cin = x_nhwc.shape
    kh, kw, _, Cout = w.shape
    pad = (kh - 1) // 2
    xp = x_nhwc if pad == 0 else jnp.pad(x_nhwc, ((0, 0), (pad, pad), (pad, pad), (0, 0)))
    Hp, Wp = H + 2 * pad, W + 2 * pad

    # fold BN scale into the weights (one-time); feed the MXU bf16 weights
    wf = (w * scale[0][None, None, None, :]).reshape(kh * kw, Cin, Cout).astype(jnp.bfloat16)

    kernel = functools.partial(_conv_bn_silu_kernel, kh=kh, kw=kw, hout=H, wout=W)
    out = pl.pallas_call(
        kernel,
        out_shape=jax.ShapeDtypeStruct((B, H * W, Cout), x_nhwc.dtype),
        grid=(B,),
        in_specs=[
            pl.BlockSpec((None, Hp, Wp, Cin), lambda b: (b, 0, 0, 0)),
            pl.BlockSpec((kh * kw, Cin, Cout), lambda b: (0, 0, 0)),
            pl.BlockSpec((1, Cout), lambda b: (0, 0)),
        ],
        out_specs=pl.BlockSpec((None, H * W, Cout), lambda b: (b, 0, 0)),
        compiler_params=pltpu.CompilerParams(
            dimension_semantics=("parallel",),
            vmem_limit_bytes=32 * 1024 * 1024),
    )(xp, wf, bias)
    return out.reshape(B, H, W, Cout)


def _transformer_stack(t, tp, *, heads, dim_head):
    """Full transformer (all layers) in one pallas_call; token slab stays in VMEM."""
    B, P, N, D = t.shape
    depth = tp['wqkv'].shape[0]
    inner = heads * dim_head
    mlp = tp['w1'].shape[-1]

    # fold 1/sqrt(dim_head) into the Q columns of Wqkv (one-time); bf16 MXU weights
    col_scale = jnp.concatenate([jnp.full((inner,), dim_head ** -0.5, jnp.float32),
                                 jnp.ones((2 * inner,), jnp.float32)])
    wqkv = (tp['wqkv'] * col_scale).astype(jnp.bfloat16)
    wo = tp['wo'].astype(jnp.bfloat16)
    w1 = tp['w1'].astype(jnp.bfloat16)
    w2 = tp['w2'].astype(jnp.bfloat16)

    def lspec(shape):   # per-layer weight block, indexed by the depth grid axis
        return pl.BlockSpec((None,) + shape, lambda b, l: (l,) + (0,) * len(shape))

    kernel = functools.partial(_transformer_stack_kernel, heads=heads, dim_head=dim_head)
    return pl.pallas_call(
        kernel,
        out_shape=jax.ShapeDtypeStruct((B, P, N, D), t.dtype),
        grid=(B, depth),                                 # depth innermost, sequential
        in_specs=[
            pl.BlockSpec((None, P, N, D), lambda b, l: (b, 0, 0, 0)),
            lspec((1, D)), lspec((1, D)),                # ln1 gamma / beta
            lspec((D, 3 * inner)),                       # Wqkv (Q pre-scaled, bf16)
            lspec((inner, D)), lspec((1, D)),            # Wo, bo
            lspec((1, D)), lspec((1, D)),                # ln2 gamma / beta
            lspec((D, mlp)), lspec((1, mlp)),            # W1, b1
            lspec((mlp, D)), lspec((1, D)),              # W2, b2
        ],
        out_specs=pl.BlockSpec((None, P, N, D), lambda b, l: (b, 0, 0, 0)),
        compiler_params=pltpu.CompilerParams(
            dimension_semantics=("parallel", "arbitrary"),
            vmem_limit_bytes=32 * 1024 * 1024),
    )(t, tp['ln1_g'], tp['ln1_b'], wqkv, wo, tp['bo'],
      tp['ln2_g'], tp['ln2_b'], w1, tp['b1'], w2, tp['b2'])


def mvit_block_forward(x_nchw, params, patch_size, *, heads=4, dim_head=8):
    """Pallas implementation of MViTBlock.forward.  Input/output are NCHW."""
    x = jnp.transpose(x_nchw, (0, 2, 3, 1))              # NCHW -> NHWC
    x_hat = x                                             # x.clone()
    x1 = _conv_bn_silu(x, params['conv1'])                # conv1 (nxn)
    x2 = _conv_bn_silu(x1, params['conv2'])               # conv2 (1x1, channels -> dim)

    B, Hf, Wf, D = x2.shape
    ph, pw = min(Hf, patch_size[0]), min(Wf, patch_size[1])
    hg, wg = Hf // ph, Wf // pw
    # rearrange 'b d (h ph) (w pw) -> b (ph pw) (h w) d'
    t = (x2.reshape(B, hg, ph, wg, pw, D)
           .transpose(0, 2, 4, 1, 3, 5)
           .reshape(B, ph * pw, hg * wg, D))

    t = _transformer_stack(t, params['transformer'], heads=heads, dim_head=dim_head)

    # rearrange 'b (ph pw) (h w) d -> b d (h ph) (w pw)'
    x3 = (t.reshape(B, ph, pw, hg, wg, D)
            .transpose(0, 3, 1, 4, 2, 5)
            .reshape(B, Hf, Wf, D))

    x4 = _conv_bn_silu(x3, params['conv3'])               # conv3 (1x1, dim -> channels)
    xc = jnp.concatenate([x4, x_hat], axis=-1)            # cat along channels
    out = _conv_bn_silu(xc, params['conv4'])              # conv4 (nxn, 2c -> c)
    return jnp.transpose(out, (0, 3, 1, 2))               # NHWC -> NCHW


# --------------------------- parameter init ---------------------------------

def init_params(key, channels, dim, kernel_size, depth, heads, dim_head, mlp_dim):
    keys = iter(jax.random.split(key, 128))

    def nrm(shape, s=0.1):
        return (s * jax.random.normal(next(keys), shape)).astype(jnp.float32)

    def bn(cout):
        # BatchNorm folded to inference-time per-channel scale/bias.
        return {'scale': (1.0 + 0.1 * jax.random.normal(next(keys), (1, cout))).astype(jnp.float32),
                'bias': nrm((1, cout))}

    inner = heads * dim_head
    params = {
        'conv1': {'w': nrm((kernel_size, kernel_size, channels, channels)), **bn(channels)},
        'conv2': {'w': nrm((1, 1, channels, dim)), **bn(dim)},
        'conv3': {'w': nrm((1, 1, dim, channels)), **bn(channels)},
        'conv4': {'w': nrm((kernel_size, kernel_size, 2 * channels, channels)), **bn(channels)},
        'transformer': {                                  # stacked over depth
            'ln1_g': 1.0 + nrm((depth, 1, dim)), 'ln1_b': nrm((depth, 1, dim)),
            'wqkv': nrm((depth, dim, 3 * inner)),
            'wo': nrm((depth, inner, dim)), 'bo': nrm((depth, 1, dim)),
            'ln2_g': 1.0 + nrm((depth, 1, dim)), 'ln2_b': nrm((depth, 1, dim)),
            'w1': nrm((depth, dim, mlp_dim)), 'b1': nrm((depth, 1, mlp_dim)),
            'w2': nrm((depth, mlp_dim, dim)), 'b2': nrm((depth, 1, dim)),
        },
    }
    return params


# --------------------------- plain-JAX reference ----------------------------

def reference_forward(x_nchw, params, patch_size, *, heads, dim_head):
    x = jnp.transpose(x_nchw, (0, 2, 3, 1))
    x_hat = x

    def conv(x, p):
        w = p['w']
        pad = (w.shape[0] - 1) // 2
        y = jax.lax.conv_general_dilated(x, w, (1, 1), [(pad, pad), (pad, pad)],
                                         dimension_numbers=('NHWC', 'HWIO', 'NHWC'))
        y = y * p['scale'][0] + p['bias'][0]
        return y * jax.nn.sigmoid(y)

    def ln(t, g, b):
        mu = t.mean(-1, keepdims=True)
        var = ((t - mu) ** 2).mean(-1, keepdims=True)
        return (t - mu) * jax.lax.rsqrt(var + 1e-5) * g + b

    x1 = conv(x, params['conv1'])
    x2 = conv(x1, params['conv2'])
    B, Hf, Wf, D = x2.shape
    ph, pw = min(Hf, patch_size[0]), min(Wf, patch_size[1])
    hg, wg = Hf // ph, Wf // pw
    P, N = ph * pw, hg * wg
    t = x2.reshape(B, hg, ph, wg, pw, D).transpose(0, 2, 4, 1, 3, 5).reshape(B, P, N, D)
    inner = heads * dim_head
    tp = params['transformer']
    depth = tp['wqkv'].shape[0]
    for l in range(depth):
        y = ln(t, tp['ln1_g'][l], tp['ln1_b'][l])
        q, k, v = jnp.split(y @ tp['wqkv'][l], 3, axis=-1)
        split = lambda a: a.reshape(B, P, N, heads, dim_head).transpose(0, 1, 3, 2, 4)
        qh, kh, vh = split(q), split(k), split(v)
        dots = jnp.einsum('bphnd,bphmd->bphnm', qh, kh) * (dim_head ** -0.5)
        attn = jax.nn.softmax(dots, axis=-1)
        o = jnp.einsum('bphnm,bphmd->bphnd', attn, vh).transpose(0, 1, 3, 2, 4).reshape(B, P, N, inner)
        t = t + o @ tp['wo'][l] + tp['bo'][l]
        z = ln(t, tp['ln2_g'][l], tp['ln2_b'][l])
        h1 = z @ tp['w1'][l] + tp['b1'][l]
        h1 = h1 * jax.nn.sigmoid(h1)
        t = t + h1 @ tp['w2'][l] + tp['b2'][l]
    x3 = t.reshape(B, ph, pw, hg, wg, D).transpose(0, 3, 1, 4, 2, 5).reshape(B, Hf, Wf, D)
    x4 = conv(x3, params['conv3'])
    out = conv(jnp.concatenate([x4, x_hat], axis=-1), params['conv4'])
    return jnp.transpose(out, (0, 3, 1, 2))


# --------------------------------- main --------------------------------------

if __name__ == "__main__":
    B, C, H, W = 2, 4, 16, 16          # input: NCHW like PyTorch
    DIM, DEPTH, KSIZE = 32, 2, 3
    PATCH = (2, 2)
    EXPANSION = 4                      # Transformer MLP hidden size
    HEADS, DIM_HEAD = 4, 8             # Transformer(dim, depth, 4, 8, expansion, dropout)

    key = jax.random.PRNGKey(0)
    kx, kp = jax.random.split(key)
    x_nchw = jax.random.normal(kx, (B, C, H, W), dtype=jnp.float32)
    params = init_params(kp, C, DIM, KSIZE, DEPTH, HEADS, DIM_HEAD, EXPANSION)

    out = mvit_block_forward(x_nchw, params, PATCH, heads=HEADS, dim_head=DIM_HEAD)
    out = jax.block_until_ready(out)

    ref = jax.block_until_ready(
        reference_forward(x_nchw, params, PATCH, heads=HEADS, dim_head=DIM_HEAD))

    assert out.shape == (B, C, H, W), out.shape
    assert bool(jnp.all(jnp.isfinite(out)))
    max_err = float(jnp.max(jnp.abs(out - ref)))
    # kernel feeds the MXU bf16 operands (f32 accumulation); reference is pure f32,
    # so allow a slightly looser tolerance than an f32-vs-f32 comparison would.
    assert bool(jnp.allclose(out, ref, rtol=5e-2, atol=5e-2)), f"max_err={max_err}"
    print("KERNEL_OK")
</pallas_src>

<mosaic_0001>
module attributes {stable_mosaic.version = 11 : i64} {
  func.func @_conv_bn_silu_kernel(%arg0: i32, %arg1: memref<1x18x18x4xf32, #tpu.memory_space<vmem>>, %arg2: memref<9x4x4xbf16, #tpu.memory_space<vmem>>, %arg3: memref<1x4xf32, #tpu.memory_space<vmem>>, %arg4: memref<1x256x4xf32, #tpu.memory_space<vmem>>) attributes {dimension_semantics = [#tpu.dimension_semantics<parallel>], iteration_bounds = array<i64: 2>, scalar_prefetch = 0 : i64, scratch_operands = 0 : i64, tpu.core_type = #tpu.core_type<tc>, window_params = [{transform_indices = @transform_0, window_bounds = array<i64: 1, 18, 18, 4>}, {pipeline_mode = #tpu.pipeline_mode<synchronous>, transform_indices = @transform_1, window_bounds = array<i64: 9, 4, 4>}, {pipeline_mode = #tpu.pipeline_mode<synchronous>, transform_indices = @transform_2, window_bounds = array<i64: 1, 4>}, {transform_indices = @transform_3, window_bounds = array<i64: 1, 256, 4>}]} {
    %c0 = arith.constant 0 : index
    %c0_0 = arith.constant 0 : index
    %c0_1 = arith.constant 0 : index
    %c0_2 = arith.constant 0 : index
    %0 = vector.load %arg1[%c0, %c0_0, %c0_1, %c0_2] : memref<1x18x18x4xf32, #tpu.memory_space<vmem>>, vector<1x18x18x4xf32>
    %1 = vector.shape_cast %0 : vector<1x18x18x4xf32> to vector<18x18x4xf32>
    %cst = arith.constant 0.000000e+00 : f32
    %2 = vector.broadcast %cst : f32 to vector<256x4xf32>
    %3 = vector.extract_strided_slice %1 {offsets = [0, 0, 0], sizes = [16, 16, 4], strides = [1, 1, 1]} : vector<18x18x4xf32> to vector<16x16x4xf32>
    %4 = vector.shape_cast %3 : vector<16x16x4xf32> to vector<256x4xf32>
    %5 = arith.truncf %4 : vector<256x4xf32> to vector<256x4xbf16>
    %c0_3 = arith.constant 0 : index
    %c0_4 = arith.constant 0 : index
    %c0_5 = arith.constant 0 : index
    %6 = vector.load %arg2[%c0_3, %c0_4, %c0_5] : memref<9x4x4xbf16, #tpu.memory_space<vmem>>, vector<1x4x4xbf16>
    %7 = vector.shape_cast %6 : vector<1x4x4xbf16> to vector<4x4xbf16>
    %cst_6 = arith.constant dense<0.000000e+00> : vector<256x4xf32>
    %8 = tpu.matmul %5, %7, %cst_6 {dimension_numbers = #tpu.dot_dimension_numbers<[1], [0], [0], [1], [0, 0, 1, 1], [], []>} : vector<256x4xbf16>, vector<4x4xbf16>, vector<256x4xf32> -> vector<256x4xf32>
    %9 = arith.addf %2, %8 : vector<256x4xf32>
    %10 = vector.extract_strided_slice %1 {offsets = [0, 1, 0], sizes = [16, 16, 4], strides = [1, 1, 1]} : vector<18x18x4xf32> to vector<16x16x4xf32>
    %11 = vector.shape_cast %10 : vector<16x16x4xf32> to vector<256x4xf32>
    %12 = arith.truncf %11 : vector<256x4xf32> to vector<256x4xbf16>
    %c1 = arith.constant 1 : index
    %c0_7 = arith.constant 0 : index
    %c0_8 = arith.constant 0 : index
    %13 = vector.load %arg2[%c1, %c0_7, %c0_8] : memref<9x4x4xbf16, #tpu.memory_space<vmem>>, vector<1x4x4xbf16>
    %14 = vector.shape_cast %13 : vector<1x4x4xbf16> to vector<4x4xbf16>
    %cst_9 = arith.constant dense<0.000000e+00> : vector<256x4xf32>
    %15 = tpu.matmul %12, %14, %cst_9 {dimension_numbers = #tpu.dot_dimension_numbers<[1], [0], [0], [1], [0, 0, 1, 1], [], []>} : vector<256x4xbf16>, vector<4x4xbf16>, vector<256x4xf32> -> vector<256x4xf32>
    %16 = arith.addf %9, %15 : vector<256x4xf32>
    %17 = vector.extract_strided_slice %1 {offsets = [0, 2, 0], sizes = [16, 16, 4], strides = [1, 1, 1]} : vector<18x18x4xf32> to vector<16x16x4xf32>
    %18 = vector.shape_cast %17 : vector<16x16x4xf32> to vector<256x4xf32>
    %19 = arith.truncf %18 : vector<256x4xf32> to vector<256x4xbf16>
    %c2 = arith.constant 2 : index
    %c0_10 = arith.constant 0 : index
    %c0_11 = arith.constant 0 : index
    %20 = vector.load %arg2[%c2, %c0_10, %c0_11] : memref<9x4x4xbf16, #tpu.memory_space<vmem>>, vector<1x4x4xbf16>
    %21 = vector.shape_cast %20 : vector<1x4x4xbf16> to vector<4x4xbf16>
    %cst_12 = arith.constant dense<0.000000e+00> : vector<256x4xf32>
    %22 = tpu.matmul %19, %21, %cst_12 {dimension_numbers = #tpu.dot_dimension_numbers<[1], [0], [0], [1], [0, 0, 1, 1], [], []>} : vector<256x4xbf16>, vector<4x4xbf16>, vector<256x4xf32> -> vector<256x4xf32>
    %23 = arith.addf %16, %22 : vector<256x4xf32>
    %24 = vector.extract_strided_slice %1 {offsets = [1, 0, 0], sizes = [16, 16, 4], strides = [1, 1, 1]} : vector<18x18x4xf32> to vector<16x16x4xf32>
    %25 = vector.shape_cast %24 : vector<16x16x4xf32> to vector<256x4xf32>
    %26 = arith.truncf %25 : vector<256x4xf32> to vector<256x4xbf16>
    %c3 = arith.constant 3 : index
    %c0_13 = arith.constant 0 : index
    %c0_14 = arith.constant 0 : index
    %27 = vector.load %arg2[%c3, %c0_13, %c0_14] : memref<9x4x4xbf16, #tpu.memory_space<vmem>>, vector<1x4x4xbf16>
    %28 = vector.shape_cast %27 : vector<1x4x4xbf16> to vector<4x4xbf16>
    %cst_15 = arith.constant dense<0.000000e+00> : vector<256x4xf32>
    %29 = tpu.matmul %26, %28, %cst_15 {dimension_numbers = #tpu.dot_dimension_numbers<[1], [0], [0], [1], [0, 0, 1, 1], [], []>} : vector<256x4xbf16>, vector<4x4xbf16>, vector<256x4xf32> -> vector<256x4xf32>
    %30 = arith.addf %23, %29 : vector<256x4xf32>
    %31 = vector.extract_strided_slice %1 {offsets = [1, 1, 0], sizes = [16, 16, 4], strides = [1, 1, 1]} : vector<18x18x4xf32> to vector<16x16x4xf32>
    %32 = vector.shape_cast %31 : vector<16x16x4xf32> to vector<256x4xf32>
    %33 = arith.truncf %32 : vector<256x4xf32> to vector<256x4xbf16>
    %c4 = arith.constant 4 : index
    %c0_16 = arith.constant 0 : index
    %c0_17 = arith.constant 0 : index
    %34 = vector.load %arg2[%c4, %c0_16, %c0_17] : memref<9x4x4xbf16, #tpu.memory_space<vmem>>, vector<1x4x4xbf16>
    %35 = vector.shape_cast %34 : vector<1x4x4xbf16> to vector<4x4xbf16>
    %cst_18 = arith.constant dense<0.000000e+00> : vector<256x4xf32>
    %36 = tpu.matmul %33, %35, %cst_18 {dimension_numbers = #tpu.dot_dimension_numbers<[1], [0], [0], [1], [0, 0, 1, 1], [], []>} : vector<256x4xbf16>, vector<4x4xbf16>, vector<256x4xf32> -> vector<256x4xf32>
    %37 = arith.addf %30, %36 : vector<256x4xf32>
    %38 = vector.extract_strided_slice %1 {offsets = [1, 2, 0], sizes = [16, 16, 4], strides = [1, 1, 1]} : vector<18x18x4xf32> to vector<16x16x4xf32>
    %39 = vector.shape_cast %38 : vector<16x16x4xf32> to vector<256x4xf32>
    %40 = arith.truncf %39 : vector<256x4xf32> to vector<256x4xbf16>
    %c5 = arith.constant 5 : index
    %c0_19 = arith.constant 0 : index
    %c0_20 = arith.constant 0 : index
    %41 = vector.load %arg2[%c5, %c0_19, %c0_20] : memref<9x4x4xbf16, #tpu.memory_space<vmem>>, vector<1x4x4xbf16>
    %42 = vector.shape_cast %41 : vector<1x4x4xbf16> to vector<4x4xbf16>
    %cst_21 = arith.constant dense<0.000000e+00> : vector<256x4xf32>
    %43 = tpu.matmul %40, %42, %cst_21 {dimension_numbers = #tpu.dot_dimension_numbers<[1], [0], [0], [1], [0, 0, 1, 1], [], []>} : vector<256x4xbf16>, vector<4x4xbf16>, vector<256x4xf32> -> vector<256x4xf32>
    %44 = arith.addf %37, %43 : vector<256x4xf32>
    %45 = vector.extract_strided_slice %1 {offsets = [2, 0, 0], sizes = [16, 16, 4], strides = [1, 1, 1]} : vector<18x18x4xf32> to vector<16x16x4xf32>
    %46 = vector.shape_cast %45 : vector<16x16x4xf32> to vector<256x4xf32>
    %47 = arith.truncf %46 : vector<256x4xf32> to vector<256x4xbf16>
    %c6 = arith.constant 6 : index
    %c0_22 = arith.constant 0 : index
    %c0_23 = arith.constant 0 : index
    %48 = vector.load %arg2[%c6, %c0_22, %c0_23] : memref<9x4x4xbf16, #tpu.memory_space<vmem>>, vector<1x4x4xbf16>
    %49 = vector.shape_cast %48 : vector<1x4x4xbf16> to vector<4x4xbf16>
    %cst_24 = arith.constant dense<0.000000e+00> : vector<256x4xf32>
    %50 = tpu.matmul %47, %49, %cst_24 {dimension_numbers = #tpu.dot_dimension_numbers<[1], [0], [0], [1], [0, 0, 1, 1], [], []>} : vector<256x4xbf16>, vector<4x4xbf16>, vector<256x4xf32> -> vector<256x4xf32>
    %51 = arith.addf %44, %50 : vector<256x4xf32>
    %52 = vector.extract_strided_slice %1 {offsets = [2, 1, 0], sizes = [16, 16, 4], strides = [1, 1, 1]} : vector<18x18x4xf32> to vector<16x16x4xf32>
    %53 = vector.shape_cast %52 : vector<16x16x4xf32> to vector<256x4xf32>
    %54 = arith.truncf %53 : vector<256x4xf32> to vector<256x4xbf16>
    %c7 = arith.constant 7 : index
    %c0_25 = arith.constant 0 : index
    %c0_26 = arith.constant 0 : index
    %55 = vector.load %arg2[%c7, %c0_25, %c0_26] : memref<9x4x4xbf16, #tpu.memory_space<vmem>>, vector<1x4x4xbf16>
    %56 = vector.shape_cast %55 : vector<1x4x4xbf16> to vector<4x4xbf16>
    %cst_27 = arith.constant dense<0.000000e+00> : vector<256x4xf32>
    %57 = tpu.matmul %54, %56, %cst_27 {dimension_numbers = #tpu.dot_dimension_numbers<[1], [0], [0], [1], [0, 0, 1, 1], [], []>} : vector<256x4xbf16>, vector<4x4xbf16>, vector<256x4xf32> -> vector<256x4xf32>
    %58 = arith.addf %51, %57 : vector<256x4xf32>
    %59 = vector.extract_strided_slice %1 {offsets = [2, 2, 0], sizes = [16, 16, 4], strides = [1, 1, 1]} : vector<18x18x4xf32> to vector<16x16x4xf32>
    %60 = vector.shape_cast %59 : vector<16x16x4xf32> to vector<256x4xf32>
    %61 = arith.truncf %60 : vector<256x4xf32> to vector<256x4xbf16>
    %c8 = arith.constant 8 : index
    %c0_28 = arith.constant 0 : index
    %c0_29 = arith.constant 0 : index
    %62 = vector.load %arg2[%c8, %c0_28, %c0_29] : memref<9x4x4xbf16, #tpu.memory_space<vmem>>, vector<1x4x4xbf16>
    %63 = vector.shape_cast %62 : vector<1x4x4xbf16> to vector<4x4xbf16>
    %cst_30 = arith.constant dense<0.000000e+00> : vector<256x4xf32>
    %64 = tpu.matmul %61, %63, %cst_30 {dimension_numbers = #tpu.dot_dimension_numbers<[1], [0], [0], [1], [0, 0, 1, 1], [], []>} : vector<256x4xbf16>, vector<4x4xbf16>, vector<256x4xf32> -> vector<256x4xf32>
    %65 = arith.addf %58, %64 : vector<256x4xf32>
    %c0_31 = arith.constant 0 : index
    %c0_32 = arith.constant 0 : index
    %66 = vector.load %arg3[%c0_31, %c0_32] : memref<1x4xf32, #tpu.memory_space<vmem>>, vector<1x4xf32>
    %67 = vector.broadcast %66 : vector<1x4xf32> to vector<256x4xf32>
    %68 = arith.addf %65, %67 : vector<256x4xf32>
    %69 = arith.negf %68 : vector<256x4xf32>
    %70 = math.exp %69 : vector<256x4xf32>
    %cst_33 = arith.constant 1.000000e+00 : f32
    %71 = vector.broadcast %cst_33 : f32 to vector<256x4xf32>
    %72 = arith.addf %71, %70 : vector<256x4xf32>
    %73 = arith.divf %71, %72 : vector<256x4xf32>
    %74 = arith.mulf %68, %73 : vector<256x4xf32>
    %c0_34 = arith.constant 0 : index
    %c0_35 = arith.constant 0 : index
    %c0_36 = arith.constant 0 : index
    %75 = vector.load %arg4[%c0_34, %c0_35, %c0_36] : memref<1x256x4xf32, #tpu.memory_space<vmem>>, vector<1x256x4xf32>
    %76 = vector.shape_cast %75 : vector<1x256x4xf32> to vector<256x4xf32>
    %77 = vector.shape_cast %74 : vector<256x4xf32> to vector<1x256x4xf32>
    tpu.vector_store %arg4[%c0_34, %c0_35, %c0_36], %77 {strides = array<i32>} : memref<1x256x4xf32, #tpu.memory_space<vmem>>, vector<1x256x4xf32>,
    return
  }
  func.func @transform_0(%arg0: i32) -> (i32, i32, i32, i32) {
    %c0_i32 = arith.constant 0 : i32
    %c0_i32_0 = arith.constant 0 : i32
    %c0_i32_1 = arith.constant 0 : i32
    %c0_i32_2 = arith.constant 0 : i32
    return %arg0, %c0_i32, %c0_i32_0, %c0_i32_1 : i32, i32, i32, i32
  }
  func.func @transform_1(%arg0: i32) -> (i32, i32, i32) {
    %c0_i32 = arith.constant 0 : i32
    %c0_i32_0 = arith.constant 0 : i32
    %c0_i32_1 = arith.constant 0 : i32
    %c0_i32_2 = arith.constant 0 : i32
    return %c0_i32, %c0_i32_0, %c0_i32_1 : i32, i32, i32
  }
  func.func @transform_2(%arg0: i32) -> (i32, i32) {
    %c0_i32 = arith.constant 0 : i32
    %c0_i32_0 = arith.constant 0 : i32
    %c0_i32_1 = arith.constant 0 : i32
    return %c0_i32, %c0_i32_0 : i32, i32
  }
  func.func @transform_3(%arg0: i32) -> (i32, i32, i32) {
    %c0_i32 = arith.constant 0 : i32
    %c0_i32_0 = arith.constant 0 : i32
    %c0_i32_1 = arith.constant 0 : i32
    return %arg0, %c0_i32, %c0_i32_0 : i32, i32, i32
  }
}

</mosaic_0001>

<llo_original>
// kernel: tpu_custom_call.1
$region0: #{tpu_custom_call.1}
  #allocation0 [shape = 'u32[]', space=smem, size = 0x4, offset = 0x4, fixed_abs, tag = 'smem constant byte address 0x4 - core index']
  #allocation1 [shape = 'u32[144,128]{1,0:T(1,128)}', space=vmem, size = 0x12000, scoped, tag = 'internal scratch']
  %s0 = inlined_call_operand.vmem [shape: f32[2,18,18,4], index: 0, kind: input, shape index: {}]
  %s1 = inlined_call_operand.vmem [shape: bf16[9,4,4], index: 1, kind: input, shape index: {}]
  %s2 = inlined_call_operand.vmem [shape: f32[1,4], index: 2, kind: input, shape index: {}]
  %s3 = inlined_call_operand.vmem [shape: f32[2,256,4], index: 3, kind: output, shape index: {}]
  %s4 = sld [smem:[#allocation0]]
  $region45: #{tpu_custom_call.1} parent=0
    _
  %s6 = ssub.s32 1, %s4
  %s7 = scalar_select 0, %s6, %s4
  loop: start=0, step=1, limit=4
  $region2: #{tpu_custom_call.1} parent=0 // loop_pre_header
    _
  $region3: #{tpu_custom_call.1} parent=0 // loop_header
    %s9 = sphi 0, %s13
    %p10 = scmp.ge.s32.totalorder %s9, 4
    %s19 = sphi 0, %s21
    %s22 = sphi 0, %s19
    %s23 = sphi 0, %s22
    %s39 = sphi 0, %s23
    %s43 = sphi 0, %s43
    %s45 = sphi 0, %s43
    %s46 = sphi 0, %s45
    %s60 = sphi 0, %s46
    %s64 = sphi 0, %s64
    %s66 = sphi 0, %s64
    %s67 = sphi 0, %s66
    %s81 = sphi 0, %s67
    %s87 = sphi 0, %s89
    %s90 = sphi 0, %s87
    %s91 = sphi 0, %s90
    %s107 = sphi 0, %s91
  $region4: #{tpu_custom_call.1} parent=0 // loop_header_branch
    %12 = sbr.rel (%p10) target = $region8
  $region5: #{tpu_custom_call.1} parent=0 // loop_body
    %s14 = ssub.s32 %s9, 1
    %s15 = ssub.s32 %s9, 2
    %s16 = sadd.s32 %s9, 1
    %s17 = ssub.s32 %s9, %s16
    %p18 = scmp.eq.s32.totalorder %s17, 0
    %s20 = sadd.s32 %s19, 1
    %s21 = scalar_select %p18, %s19, %s20
    %p24 = pneg %p18
    %p25 = scmp.eq.s32.totalorder %s9, 1
    %p26 = por %p24, %p25
    %p27 = scmp.ne.s32.totalorder %s19, %s22
    %p28 = scmp.eq.s32.totalorder %s9, 0
    %p29 = por %p27, %p28
    %p30 = scmp.ne.s32.totalorder %s19, %s22
    %p31 = scmp.eq.s32.totalorder %s14, 1
    %p32 = por %p30, %p31
    %p33 = scmp.ne.s32.totalorder %s22, %s23
    %p34 = scmp.eq.s32.totalorder %s14, 0
    %p35 = por %p33, %p34
    %p36 = scmp.ne.s32.totalorder %s22, %s23
    %p37 = scmp.eq.s32.totalorder %s15, 1
    %p38 = por %p36, %p37
    %p40 = scmp.ne.s32.totalorder %s23, %s39
    %p41 = scmp.eq.s32.totalorder %s15, 0
    %p42 = por %p40, %p41
    %s44 = sadd.s32 %s43, 1
    %p47 = scmp.eq.s32.totalorder %s9, 1
    %p48 = scmp.ne.s32.totalorder %s43, %s45
    %p49 = scmp.eq.s32.totalorder %s9, 0
    %p50 = por %p48, %p49
    %p51 = scmp.ne.s32.totalorder %s43, %s45
    %p52 = scmp.eq.s32.totalorder %s14, 1
    %p53 = por %p51, %p52
    %p54 = scmp.ne.s32.totalorder %s45, %s46
    %p55 = scmp.eq.s32.totalorder %s14, 0
    %p56 = por %p54, %p55
    %p57 = scmp.ne.s32.totalorder %s45, %s46
    %p58 = scmp.eq.s32.totalorder %s15, 1
    %p59 = por %p57, %p58
    %p61 = scmp.ne.s32.totalorder %s46, %s60
    %p62 = scmp.eq.s32.totalorder %s15, 0
    %p63 = por %p61, %p62
    %s65 = sadd.s32 %s64, 1
    %p68 = scmp.eq.s32.totalorder %s9, 1
    %p69 = scmp.ne.s32.totalorder %s64, %s66
    %p70 = scmp.eq.s32.totalorder %s9, 0
    %p71 = por %p69, %p70
    %p72 = scmp.ne.s32.totalorder %s64, %s66
    %p73 = scmp.eq.s32.totalorder %s14, 1
    %p74 = por %p72, %p73
    %p75 = scmp.ne.s32.totalorder %s66, %s67
    %p76 = scmp.eq.s32.totalorder %s14, 0
    %p77 = por %p75, %p76
    %p78 = scmp.ne.s32.totalorder %s66, %s67
    %p79 = scmp.eq.s32.totalorder %s15, 1
    %p80 = por %p78, %p79
    %p82 = scmp.ne.s32.totalorder %s67, %s81
    %p83 = scmp.eq.s32.totalorder %s15, 0
    %p84 = por %p82, %p83
    %s85 = ssub.s32 %s9, %s16
    %p86 = scmp.eq.s32.totalorder %s85, 0
    %s88 = sadd.s32 %s87, 1
    %s89 = scalar_select %p86, %s87, %s88
    %p92 = pneg %p86
    %p93 = scmp.eq.s32.totalorder %s9, 1
    %p94 = por %p92, %p93
    %p95 = scmp.ne.s32.totalorder %s87, %s90
    %p96 = scmp.eq.s32.totalorder %s9, 0
    %p97 = por %p95, %p96
    %p98 = scmp.ne.s32.totalorder %s87, %s90
    %p99 = scmp.eq.s32.totalorder %s14, 1
    %p100 = por %p98, %p99
    %p101 = scmp.ne.s32.totalorder %s90, %s91
    %p102 = scmp.eq.s32.totalorder %s14, 0
    %p103 = por %p101, %p102
    %p104 = scmp.ne.s32.totalorder %s90, %s91
    %p105 = scmp.eq.s32.totalorder %s15, 1
    %p106 = por %p104, %p105
    %p108 = scmp.ne.s32.totalorder %s91, %s107
    %p109 = scmp.eq.s32.totalorder %s15, 0
    %p110 = por %p108, %p109
    %p111 = scmp.le.s32.totalorder 1, %s9
    %p112 = scmp.lt.s32.totalorder %s9, 3
    %p113 = pnand %p111, %p112
    %p114 = pneg %p113
    // Predicated region
    $region9: #{tpu_custom_call.1} parent=5 // pred_check
      _
    $region10: #{tpu_custom_call.1} parent=5 // pred_check_branch
      %116 = sbr.rel (%p113) target = $region12
    $region11: #{tpu_custom_call.1} parent=5 // pred_region
      %s117 = ssub.s32 %s9, 1
      // Predicated region
      $region13: #{tpu_custom_call.1} parent=11 // pred_check
        %p118 = pneg %p56
      $region14: #{tpu_custom_call.1} parent=11 // pred_check_branch
        %120 = sbr.rel (%p118) target = $region16
      $region15: #{tpu_custom_call.1} parent=11 // pred_region
        _
      $region16: #{tpu_custom_call.1} parent=11 // pred_fallthru
        _
      // Predicated region
      $region17: #{tpu_custom_call.1} parent=11 // pred_check
        %p121 = pneg %p77
      $region18: #{tpu_custom_call.1} parent=11 // pred_check_branch
        %123 = sbr.rel (%p121) target = $region20
      $region19: #{tpu_custom_call.1} parent=11 // pred_region
        _
      $region20: #{tpu_custom_call.1} parent=11 // pred_fallthru
        _
    $region12: #{tpu_custom_call.1} parent=5 // pred_fallthru
      _
    %p124 = scmp.lt.s32.totalorder %s9, 2
    // Predicated region
    $region21: #{tpu_custom_call.1} parent=5 // pred_check
      %p125 = pneg %p124
    $region22: #{tpu_custom_call.1} parent=5 // pred_check_branch
      %127 = sbr.rel (%p125) target = $region24
    $region23: #{tpu_custom_call.1} parent=5 // pred_region
      // Predicated region
      $region25: #{tpu_custom_call.1} parent=23 // pred_check
        %p128 = pneg %p29
      $region26: #{tpu_custom_call.1} parent=23 // pred_check_branch
        %130 = sbr.rel (%p128) target = $region28
      $region27: #{tpu_custom_call.1} parent=23 // pred_region
        %p131 = scmp.lt.s32.totalorder %s9, 1
        %s132 = scalar_select %p131, %s9, 1
        %s133 = smul.addr %s132, 54
        %s134 = smul.addr %s133, 8
        %s135 = scalar_lea.vmem %s0, %s134
      $region28: #{tpu_custom_call.1} parent=23 // pred_fallthru
        _
    $region24: #{tpu_custom_call.1} parent=5 // pred_fallthru
      _
    %p136 = scmp.le.s32.totalorder 1, %s9
    %p137 = scmp.lt.s32.totalorder %s9, 3
    %p138 = pnand %p136, %p137
    %p139 = pneg %p138
    // Predicated region
    $region29: #{tpu_custom_call.1} parent=5 // pred_check
      _
    $region30: #{tpu_custom_call.1} parent=5 // pred_check_branch
      %141 = sbr.rel (%p138) target = $region32
    $region31: #{tpu_custom_call.1} parent=5 // pred_region
      %s142 = ssub.s32 %s9, 1
      %p143 = scmp.lt.s32.totalorder %s14, 1
      %s144 = scalar_select %p143, %s14, 1
      %s145 = smul.addr %s144, 54
      %s146 = smul.addr %s145, 8
      %s147 = scalar_lea.vmem %s0, %s146
      %p148 = pneg %p35
      %p149 = pneg %p32
      %p150 = pneg %p56
      %p151 = pneg %p53
      %p152 = pneg %p77
      %p153 = pneg %p74
      %p154 = pneg %p103
      %p155 = pneg %p100
      %p156 = scmp.lt.s32.totalorder %s14, 1
      %s157 = scalar_select %p156, %s14, 1
      %s158 = smul.addr %s157, 32
      %s159 = smul.addr %s158, 8
      %s160 = scalar_lea.vmem %s3, %s159
      %p161 = scmp.lt.s32.totalorder %s14, 1
      %s162 = scalar_select %p161, %s14, 1
      %s163 = smul.addr %s162, 54
      %s164 = smul.addr %s163, 8
      %s165 = scalar_lea.vmem %s0, %s164
      %p166 = scmp.lt.s32.totalorder %s14, 1
      %s167 = scalar_select %p166, %s14, 1
      %s168 = smul.addr %s167, 32
      %s169 = smul.addr %s168, 8
      %s170 = scalar_lea.vmem %s3, %s169
      %v172 = vld [vmem:[%s165] sm:$0xff]
      %v173 = vld [vmem:[%s165 + $0x8] sm:$0xff]
      %v174 = vld [vmem:[%s165 + $0x10] sm:$0x3]
      %v175 = vld [vmem:[%s165 + $0x18] sm:$0xff]
      %v176 = vld [vmem:[%s165 + $0x20] sm:$0xff]
      %v177 = vld [vmem:[%s165 + $0x28] sm:$0x3]
      %v178 = vld [vmem:[%s165 + $0x30] sm:$0xff]
      %v179 = vld [vmem:[%s165 + $0x38] sm:$0xff]
      %v180 = vld [vmem:[%s165 + $0x40] sm:$0x3]
      %v181 = vld [vmem:[%s165 + $0x48] sm:$0xff]
      %v182 = vld [vmem:[%s165 + $0x50] sm:$0xff]
      %v183 = vld [vmem:[%s165 + $0x58] sm:$0x3]
      %v184 = vld [vmem:[%s165 + $0x60] sm:$0xff]
      %v185 = vld [vmem:[%s165 + $0x68] sm:$0xff]
      %v186 = vld [vmem:[%s165 + $0x70] sm:$0x3]
      %v187 = vld [vmem:[%s165 + $0x78] sm:$0xff]
      %v188 = vld [vmem:[%s165 + $0x80] sm:$0xff]
      %v189 = vld [vmem:[%s165 + $0x88] sm:$0x3]
      %v190 = vld [vmem:[%s165 + $0x90] sm:$0xff]
      %v191 = vld [vmem:[%s165 + $0x98] sm:$0xff]
      %v192 = vld [vmem:[%s165 + $0xa0] sm:$0x3]
      %v193 = vld [vmem:[%s165 + $0xa8] sm:$0xff]
      %v194 = vld [vmem:[%s165 + $0xb0] sm:$0xff]
      %v195 = vld [vmem:[%s165 + $0xb8] sm:$0x3]
      %v196 = vld [vmem:[%s165 + $0xc0] sm:$0xff]
      %v197 = vld [vmem:[%s165 + $0xc8] sm:$0xff]
      %v198 = vld [vmem:[%s165 + $0xd0] sm:$0x3]
      %v199 = vld [vmem:[%s165 + $0xd8] sm:$0xff]
      %v200 = vld [vmem:[%s165 + $0xe0] sm:$0xff]
      %v201 = vld [vmem:[%s165 + $0xe8] sm:$0x3]
      %v202 = vld [vmem:[%s165 + $0xf0] sm:$0xff]
      %v203 = vld [vmem:[%s165 + $0xf8] sm:$0xff]
      %v204 = vld [vmem:[%s165 + $0x100] sm:$0x3]
      %v205 = vld [vmem:[%s165 + $0x108] sm:$0xff]
      %v206 = vld [vmem:[%s165 + $0x110] sm:$0xff]
      %v207 = vld [vmem:[%s165 + $0x118] sm:$0x3]
      %v208 = vld [vmem:[%s165 + $0x120] sm:$0xff]
      %v209 = vld [vmem:[%s165 + $0x128] sm:$0xff]
      %v210 = vld [vmem:[%s165 + $0x130] sm:$0x3]
      %v211 = vld [vmem:[%s165 + $0x138] sm:$0xff]
      %v212 = vld [vmem:[%s165 + $0x140] sm:$0xff]
      %v213 = vld [vmem:[%s165 + $0x148] sm:$0x3]
      %v214 = vld [vmem:[%s165 + $0x150] sm:$0xff]
      %v215 = vld [vmem:[%s165 + $0x158] sm:$0xff]
      %v216 = vld [vmem:[%s165 + $0x160] sm:$0x3]
      %v217 = vld [vmem:[%s165 + $0x168] sm:$0xff]
      %v218 = vld [vmem:[%s165 + $0x170] sm:$0xff]
      %v219 = vld [vmem:[%s165 + $0x178] sm:$0x3]
      %v220 = vld [vmem:[%s165 + $0x180] sm:$0xff]
      %v221 = vld [vmem:[%s165 + $0x188] sm:$0xff]
      %v222 = vld [vmem:[%s165 + $0x190] sm:$0x3]
      %v223 = vld [vmem:[%s165 + $0x198] sm:$0xff]
      %v224 = vld [vmem:[%s165 + $0x1a0] sm:$0xff]
      %v225 = vld [vmem:[%s165 + $0x1a8] sm:$0x3]
      %v226 = vpack.c.bf16 %v173, %v172
      %v227 = vpack.c.bf16 %v176, %v175
      %v228 = vpack.c.bf16 %v179, %v178
      %v229 = vpack.c.bf16 %v182, %v181
      %v230 = vpack.c.bf16 %v185, %v184
      %v231 = vpack.c.bf16 %v188, %v187
      %v232 = vpack.c.bf16 %v191, %v190
      %v233 = vpack.c.bf16 %v194, %v193
      %v234 = vpack.c.bf16 %v197, %v196
      %v235 = vpack.c.bf16 %v200, %v199
      %v236 = vpack.c.bf16 %v203, %v202
      %v237 = vpack.c.bf16 %v206, %v205
      %v238 = vpack.c.bf16 %v209, %v208
      %v239 = vpack.c.bf16 %v212, %v211
      %v240 = vpack.c.bf16 %v215, %v214
      %v241 = vpack.c.bf16 %v218, %v217
      %v242 = vld [vmem:[%s1] sm:$0x3]
      %vm291 = vcmask 1046528
      %v292 = vrot.slane %v172, 1
      %v293 = vrot.slane %v173, 1
      %v294 = vsel %vm291, %v292, %v293
      %v295 = vrot.slane %v174, 1
      %v296 = vsel %vm291, %v293, %v295
      %v297 = vrot.slane %v175, 1
      %v298 = vrot.slane %v176, 1
      %v299 = vsel %vm291, %v297, %v298
      %v300 = vrot.slane %v177, 1
      %v301 = vsel %vm291, %v298, %v300
      %v302 = vrot.slane %v178, 1
      %v303 = vrot.slane %v179, 1
      %v304 = vsel %vm291, %v302, %v303
      %v305 = vrot.slane %v180, 1
      %v306 = vsel %vm291, %v303, %v305
      %v307 = vrot.slane %v181, 1
      %v308 = vrot.slane %v182, 1
      %v309 = vsel %vm291, %v307, %v308
      %v310 = vrot.slane %v183, 1
      %v311 = vsel %vm291, %v308, %v310
      %v312 = vrot.slane %v184, 1
      %v313 = vrot.slane %v185, 1
      %v314 = vsel %vm291, %v312, %v313
      %v315 = vrot.slane %v186, 1
      %v316 = vsel %vm291, %v313, %v315
      %v317 = vrot.slane %v187, 1
      %v318 = vrot.slane %v188, 1
      %v319 = vsel %vm291, %v317, %v318
      %v320 = vrot.slane %v189, 1
      %v321 = vsel %vm291, %v318, %v320
      %v322 = vrot.slane %v190, 1
      %v323 = vrot.slane %v191, 1
      %v324 = vsel %vm291, %v322, %v323
      %v325 = vrot.slane %v192, 1
      %v326 = vsel %vm291, %v323, %v325
      %v327 = vrot.slane %v193, 1
      %v328 = vrot.slane %v194, 1
      %v329 = vsel %vm291, %v327, %v328
      %v330 = vrot.slane %v195, 1
      %v331 = vsel %vm291, %v328, %v330
      %v332 = vrot.slane %v196, 1
      %v333 = vrot.slane %v197, 1
      %v334 = vsel %vm291, %v332, %v333
      %v335 = vrot.slane %v198, 1
      %v336 = vsel %vm291, %v333, %v335
      %v337 = vrot.slane %v199, 1
      %v338 = vrot.slane %v200, 1
      %v339 = vsel %vm291, %v337, %v338
      %v340 = vrot.slane %v201, 1
      %v341 = vsel %vm291, %v338, %v340
      %v342 = vrot.slane %v202, 1
      %v343 = vrot.slane %v203, 1
      %v344 = vsel %vm291, %v342, %v343
      %v345 = vrot.slane %v204, 1
      %v346 = vsel %vm291, %v343, %v345
      %v347 = vrot.slane %v205, 1
      %v348 = vrot.slane %v206, 1
      %v349 = vsel %vm291, %v347, %v348
      %v350 = vrot.slane %v207, 1
      %v351 = vsel %vm291, %v348, %v350
      %v352 = vrot.slane %v208, 1
      %v353 = vrot.slane %v209, 1
      %v354 = vsel %vm291, %v352, %v353
      %v355 = vrot.slane %v210, 1
      %v356 = vsel %vm291, %v353, %v355
      %v357 = vrot.slane %v211, 1
      %v358 = vrot.slane %v212, 1
      %v359 = vsel %vm291, %v357, %v358
      %v360 = vrot.slane %v213, 1
      %v361 = vsel %vm291, %v358, %v360
      %v362 = vrot.slane %v214, 1
      %v363 = vrot.slane %v215, 1
      %v364 = vsel %vm291, %v362, %v363
      %v365 = vrot.slane %v216, 1
      %v366 = vsel %vm291, %v363, %v365
      %v367 = vrot.slane %v217, 1
      %v368 = vrot.slane %v218, 1
      %v369 = vsel %vm291, %v367, %v368
      %v370 = vrot.slane %v219, 1
      %v371 = vsel %vm291, %v368, %v370
      %v404 = vpack.c.bf16 %v296, %v294
      %v405 = vpack.c.bf16 %v301, %v299
      %v406 = vpack.c.bf16 %v306, %v304
      %v407 = vpack.c.bf16 %v311, %v309
      %v408 = vpack.c.bf16 %v316, %v314
      %v409 = vpack.c.bf16 %v321, %v319
      %v410 = vpack.c.bf16 %v326, %v324
      %v411 = vpack.c.bf16 %v331, %v329
      %v412 = vpack.c.bf16 %v336, %v334
      %v413 = vpack.c.bf16 %v341, %v339
      %v414 = vpack.c.bf16 %v346, %v344
      %v415 = vpack.c.bf16 %v351, %v349
      %v416 = vpack.c.bf16 %v356, %v354
      %v417 = vpack.c.bf16 %v361, %v359
      %v418 = vpack.c.bf16 %v366, %v364
      %v419 = vpack.c.bf16 %v371, %v369
      %s420 = scalar_lea.vmem %s1, 2
      %v421 = vld [vmem:[%s420] sm:$0x3]
      %vm422 = vcmask 31744
      %v424 = vsel %vm422, %v404, 0
      %v427 = vsel %vm422, %v405, 0
      %v430 = vsel %vm422, %v406, 0
      %v433 = vsel %vm422, %v407, 0
      %v436 = vsel %vm422, %v408, 0
      %v439 = vsel %vm422, %v409, 0
      %v442 = vsel %vm422, %v410, 0
      %v445 = vsel %vm422, %v411, 0
      %v448 = vsel %vm422, %v412, 0
      %v451 = vsel %vm422, %v413, 0
      %v454 = vsel %vm422, %v414, 0
      %v457 = vsel %vm422, %v415, 0
      %v460 = vsel %vm422, %v416, 0
      %v463 = vsel %vm422, %v417, 0
      %v466 = vsel %vm422, %v418, 0
      %v469 = vsel %vm422, %v419, 0
      %vm471 = vcmask 1041408
      %v473 = vsel %vm471, %v421, 0
      %475 = vmatprep.subr.bf16.mxu0 0
      %476 = vmatpush1.bf16.msra.mxu0 %v473
      %477 = vmatprep.subr.bf16.mxu0 0
      %478 = vmatpush1.bf16.msra.mxu0 0
      %479 = vmatprep.subr.bf16.mxu0 0
      %480 = vmatpush1.bf16.msra.mxu0 0
      %481 = vmatprep.subr.bf16.mxu0 0
      %482 = vmatpush1.bf16.msra.mxu0 0
      %483 = vmatprep.subr.bf16.mxu0 0
      %484 = vmatpush1.bf16.msra.mxu0 0
      %485 = vmatprep.subr.bf16.mxu0 0
      %486 = vmatpush1.bf16.msra.mxu0 0
      %487 = vmatprep.subr.bf16.mxu0 0
      %488 = vmatpush1.bf16.msra.mxu0 0
      %489 = vmatprep.subr.bf16.mxu0 0
      %490 = vmatpush1.bf16.msra.mxu0 0
      %491 = vmatprep.subr.bf16.mxu0 0
      %492 = vmatpush1.bf16.msra.mxu0 0
      %493 = vmatprep.subr.bf16.mxu0 0
      %494 = vmatpush1.bf16.msra.mxu0 0
      %495 = vmatprep.subr.bf16.mxu0 0
      %496 = vmatpush1.bf16.msra.mxu0 0
      %497 = vmatprep.subr.bf16.mxu0 0
      %498 = vmatpush1.bf16.msra.mxu0 0
      %499 = vmatprep.subr.bf16.mxu0 0
      %500 = vmatpush1.bf16.msra.mxu0 0
      %501 = vmatprep.subr.bf16.mxu0 0
      %502 = vmatpush1.bf16.msra.mxu0 0
      %503 = vmatprep.subr.bf16.mxu0 0
      %504 = vmatpush1.bf16.msra.mxu0 0
      %505 = vmatprep.subr.bf16.mxu0 0
      %506 = vmatpush1.bf16.msra.mxu0 0
      %507 = vmatprep.mubr.bf16.mxu0 0
      %508 = vmatmul.mubr.bf16.gmra.mrb[0].mxu0 %v424
      %v509 = vpop.f32.mrb[0].mxu0
      %v510 = vadd.f32 0.0, %v509
      %v511 = vpop.f32.mrb[0].mxu0
      %v512 = vpop.f32.mrb[0].mxu0
      %v513 = vadd.f32 0.0, %v512
      %v514 = vpop.f32.mrb[0].mxu0
      %515 = vmatprep.mubr.bf16.mxu0 0
      %516 = vmatmul.mubr.bf16.gmra.mrb[0].mxu0 %v427
      %v517 = vpop.f32.mrb[0].mxu0
      %v518 = vadd.f32 0.0, %v517
      %v519 = vpop.f32.mrb[0].mxu0
      %v520 = vpop.f32.mrb[0].mxu0
      %v521 = vadd.f32 0.0, %v520
      %v522 = vpop.f32.mrb[0].mxu0
      %523 = vmatprep.mubr.bf16.mxu0 0
      %524 = vmatmul.mubr.bf16.gmra.mrb[0].mxu0 %v430
      %v525 = vpop.f32.mrb[0].mxu0
      %v526 = vadd.f32 0.0, %v525
      %v527 = vpop.f32.mrb[0].mxu0
      %v528 = vpop.f32.mrb[0].mxu0
      %v529 = vadd.f32 0.0, %v528
      %v530 = vpop.f32.mrb[0].mxu0
      %531 = vmatprep.mubr.bf16.mxu0 0
      %532 = vmatmul.mubr.bf16.gmra.mrb[0].mxu0 %v433
      %v533 = vpop.f32.mrb[0].mxu0
      %v534 = vadd.f32 0.0, %v533
      %v535 = vpop.f32.mrb[0].mxu0
      %v536 = vpop.f32.mrb[0].mxu0
      %v537 = vadd.f32 0.0, %v536
      %v538 = vpop.f32.mrb[0].mxu0
      %539 = vmatprep.mubr.bf16.mxu0 0
      %540 = vmatmul.mubr.bf16.gmra.mrb[0].mxu0 %v436
      %v541 = vpop.f32.mrb[0].mxu0
      %v542 = vadd.f32 0.0, %v541
      %v543 = vpop.f32.mrb[0].mxu0
      %v544 = vpop.f32.mrb[0].mxu0
      %v545 = vadd.f32 0.0, %v544
      %v546 = vpop.f32.mrb[0].mxu0
      %547 = vmatprep.mubr.bf16.mxu0 0
      %548 = vmatmul.mubr.bf16.gmra.mrb[0].mxu0 %v439
      %v549 = vpop.f32.mrb[0].mxu0
      %v550 = vadd.f32 0.0, %v549
      %v551 = vpop.f32.mrb[0].mxu0
      %v552 = vpop.f32.mrb[0].mxu0
      %v553 = vadd.f32 0.0, %v552
      %v554 = vpop.f32.mrb[0].mxu0
      %555 = vmatprep.mubr.bf16.mxu0 0
      %556 = vmatmul.mubr.bf16.gmra.mrb[0].mxu0 %v442
      %v557 = vpop.f32.mrb[0].mxu0
      %v558 = vadd.f32 0.0, %v557
      %v559 = vpop.f32.mrb[0].mxu0
      %v560 = vpop.f32.mrb[0].mxu0
      %v561 = vadd.f32 0.0, %v560
      %v562 = vpop.f32.mrb[0].mxu0
      %563 = vmatprep.mubr.bf16.mxu0 0
      %564 = vmatmul.mubr.bf16.gmra.mrb[0].mxu0 %v445
      %v565 = vpop.f32.mrb[0].mxu0
      %v566 = vadd.f32 0.0, %v565
      %v567 = vpop.f32.mrb[0].mxu0
      %v568 = vpop.f32.mrb[0].mxu0
      %v569 = vadd.f32 0.0, %v568
      %v570 = vpop.f32.mrb[0].mxu0
      %571 = vmatprep.mubr.bf16.mxu0 0
      %572 = vmatmul.mubr.bf16.gmra.mrb[0].mxu0 %v448
      %v573 = vpop.f32.mrb[0].mxu0
      %v574 = vadd.f32 0.0, %v573
      %v575 = vpop.f32.mrb[0].mxu0
      %v576 = vpop.f32.mrb[0].mxu0
      %v577 = vadd.f32 0.0, %v576
      %v578 = vpop.f32.mrb[0].mxu0
      %579 = vmatprep.mubr.bf16.mxu0 0
      %580 = vmatmul.mubr.bf16.gmra.mrb[0].mxu0 %v451
      %v581 = vpop.f32.mrb[0].mxu0
      %v582 = vadd.f32 0.0, %v581
      %v583 = vpop.f32.mrb[0].mxu0
      %v584 = vpop.f32.mrb[0].mxu0
      %v585 = vadd.f32 0.0, %v584
      %v586 = vpop.f32.mrb[0].mxu0
      %587 = vmatprep.mubr.bf16.mxu0 0
      %588 = vmatmul.mubr.bf16.gmra.mrb[0].mxu0 %v454
      %v589 = vpop.f32.mrb[0].mxu0
      %v590 = vadd.f32 0.0, %v589
      %v591 = vpop.f32.mrb[0].mxu0
      %v592 = vpop.f32.mrb[0].mxu0
      %v593 = vadd.f32 0.0, %v592
      %v594 = vpop.f32.mrb[0].mxu0
      %595 = vmatprep.mubr.bf16.mxu0 0
      %596 = vmatmul.mubr.bf16.gmra.mrb[0].mxu0 %v457
      %v597 = vpop.f32.mrb[0].mxu0
      %v598 = vadd.f32 0.0, %v597
      %v599 = vpop.f32.mrb[0].mxu0
      %v600 = vpop.f32.mrb[0].mxu0
      %v601 = vadd.f32 0.0, %v600
      %v602 = vpop.f32.mrb[0].mxu0
      %603 = vmatprep.mubr.bf16.mxu0 0
      %604 = vmatmul.mubr.bf16.gmra.mrb[0].mxu0 %v460
      %v605 = vpop.f32.mrb[0].mxu0
      %v606 = vadd.f32 0.0, %v605
      %v607 = vpop.f32.mrb[0].mxu0
      %v608 = vpop.f32.mrb[0].mxu0
      %v609 = vadd.f32 0.0, %v608
      %v610 = vpop.f32.mrb[0].mxu0
      %611 = vmatprep.mubr.bf16.mxu0 0
      %612 = vmatmul.mubr.bf16.gmra.mrb[0].mxu0 %v463
      %v613 = vpop.f32.mrb[0].mxu0
      %v614 = vadd.f32 0.0, %v613
      %v615 = vpop.f32.mrb[0].mxu0
      %v616 = vpop.f32.mrb[0].mxu0
      %v617 = vadd.f32 0.0, %v616
      %v618 = vpop.f32.mrb[0].mxu0
      %619 = vmatprep.mubr.bf16.mxu0 0
      %620 = vmatmul.mubr.bf16.gmra.mrb[0].mxu0 %v466
      %v621 = vpop.f32.mrb[0].mxu0
      %v622 = vadd.f32 0.0, %v621
      %v623 = vpop.f32.mrb[0].mxu0
      %v624 = vpop.f32.mrb[0].mxu0
      %v625 = vadd.f32 0.0, %v624
      %v626 = vpop.f32.mrb[0].mxu0
      %627 = vmatprep.mubr.bf16.mxu0 0
      %628 = vmatmul.mubr.bf16.gmra.mrb[0].mxu0 %v469
      %v629 = vpop.f32.mrb[0].mxu0
      %v630 = vadd.f32 0.0, %v629
      %v631 = vpop.f32.mrb[0].mxu0
      %v632 = vpop.f32.mrb[0].mxu0
      %v633 = vadd.f32 0.0, %v632
      %v634 = vpop.f32.mrb[0].mxu0
      %635 = vdwg.mxu0
      %v637 = vsel %vm422, %v226, 0
      %v640 = vsel %vm422, %v227, 0
      %v643 = vsel %vm422, %v228, 0
      %v646 = vsel %vm422, %v229, 0
      %v649 = vsel %vm422, %v230, 0
      %v652 = vsel %vm422, %v231, 0
      %v655 = vsel %vm422, %v232, 0
      %v658 = vsel %vm422, %v233, 0
      %v661 = vsel %vm422, %v234, 0
      %v664 = vsel %vm422, %v235, 0
      %v667 = vsel %vm422, %v236, 0
      %v670 = vsel %vm422, %v237, 0
      %v673 = vsel %vm422, %v238, 0
      %v676 = vsel %vm422, %v239, 0
      %v679 = vsel %vm422, %v240, 0
      %v682 = vsel %vm422, %v241, 0
      %v685 = vsel %vm471, %v242, 0
      %687 = vmatprep.subr.bf16.mxu0 0
      %688 = vmatpush1.bf16.msra.mxu0 %v685
      %689 = vmatprep.subr.bf16.mxu0 0
      %690 = vmatpush1.bf16.msra.mxu0 0
      %691 = vmatprep.subr.bf16.mxu0 0
      %692 = vmatpush1.bf16.msra.mxu0 0
      %693 = vmatprep.subr.bf16.mxu0 0
      %694 = vmatpush1.bf16.msra.mxu0 0
      %695 = vmatprep.subr.bf16.mxu0 0
      %696 = vmatpush1.bf16.msra.mxu0 0
      %697 = vmatprep.subr.bf16.mxu0 0
      %698 = vmatpush1.bf16.msra.mxu0 0
      %699 = vmatprep.subr.bf16.mxu0 0
      %700 = vmatpush1.bf16.msra.mxu0 0
      %701 = vmatprep.subr.bf16.mxu0 0
      %702 = vmatpush1.bf16.msra.mxu0 0
      %703 = vmatprep.subr.bf16.mxu0 0
      %704 = vmatpush1.bf16.msra.mxu0 0
      %705 = vmatprep.subr.bf16.mxu0 0
      %706 = vmatpush1.bf16.msra.mxu0 0
      %707 = vmatprep.subr.bf16.mxu0 0
      %708 = vmatpush1.bf16.msra.mxu0 0
      %709 = vmatprep.subr.bf16.mxu0 0
      %710 = vmatpush1.bf16.msra.mxu0 0
      %711 = vmatprep.subr.bf16.mxu0 0
      %712 = vmatpush1.bf16.msra.mxu0 0
      %713 = vmatprep.subr.bf16.mxu0 0
      %714 = vmatpush1.bf16.msra.mxu0 0
      %715 = vmatprep.subr.bf16.mxu0 0
      %716 = vmatpush1.bf16.msra.mxu0 0
      %717 = vmatprep.subr.bf16.mxu0 0
      %718 = vmatpush1.bf16.msra.mxu0 0
      %719 = vmatprep.mubr.bf16.mxu0 0
      %720 = vmatmul.mubr.bf16.gmra.mrb[0].mxu0 %v637
      %v721 = vpop.f32.mrb[0].mxu0
      %v722 = vadd.f32 %v510, %v721
      %v723 = vpop.f32.mrb[0].mxu0
      %v724 = vpop.f32.mrb[0].mxu0
      %v725 = vadd.f32 %v513, %v724
      %v726 = vpop.f32.mrb[0].mxu0
      %727 = vmatprep.mubr.bf16.mxu0 0
      %728 = vmatmul.mubr.bf16.gmra.mrb[0].mxu0 %v640
      %v729 = vpop.f32.mrb[0].mxu0
      %v730 = vadd.f32 %v518, %v729
      %v731 = vpop.f32.mrb[0].mxu0
      %v732 = vpop.f32.mrb[0].mxu0
      %v733 = vadd.f32 %v521, %v732
      %v734 = vpop.f32.mrb[0].mxu0
      %735 = vmatprep.mubr.bf16.mxu0 0
      %736 = vmatmul.mubr.bf16.gmra.mrb[0].mxu0 %v643
      %v737 = vpop.f32.mrb[0].mxu0
      %v738 = vadd.f32 %v526, %v737
      %v739 = vpop.f32.mrb[0].mxu0
      %v740 = vpop.f32.mrb[0].mxu0
      %v741 = vadd.f32 %v529, %v740
      %v742 = vpop.f32.mrb[0].mxu0
      %743 = vmatprep.mubr.bf16.mxu0 0
      %744 = vmatmul.mubr.bf16.gmra.mrb[0].mxu0 %v646
      %v745 = vpop.f32.mrb[0].mxu0
      %v746 = vadd.f32 %v534, %v745
      %v747 = vpop.f32.mrb[0].mxu0
      %v748 = vpop.f32.mrb[0].mxu0
      %v749 = vadd.f32 %v537, %v748
      %v750 = vpop.f32.mrb[0].mxu0
      %751 = vmatprep.mubr.bf16.mxu0 0
      %752 = vmatmul.mubr.bf16.gmra.mrb[0].mxu0 %v649
      %v753 = vpop.f32.mrb[0].mxu0
      %v754 = vadd.f32 %v542, %v753
      %v755 = vpop.f32.mrb[0].mxu0
      %v756 = vpop.f32.mrb[0].mxu0
      %v757 = vadd.f32 %v545, %v756
      %v758 = vpop.f32.mrb[0].mxu0
      %759 = vmatprep.mubr.bf16.mxu0 0
      %760 = vmatmul.mubr.bf16.gmra.mrb[0].mxu0 %v652
      %v761 = vpop.f32.mrb[0].mxu0
      %v762 = vadd.f32 %v550, %v761
      %v763 = vpop.f32.mrb[0].mxu0
      %v764 = vpop.f32.mrb[0].mxu0
      %v765 = vadd.f32 %v553, %v764
      %v766 = vpop.f32.mrb[0].mxu0
      %767 = vmatprep.mubr.bf16.mxu0 0
      %768 = vmatmul.mubr.bf16.gmra.mrb[0].mxu0 %v655
      %v769 = vpop.f32.mrb[0].mxu0
      %v770 = vadd.f32 %v558, %v769
      %v771 = vpop.f32.mrb[0].mxu0
      %v772 = vpop.f32.mrb[0].mxu0
      %v773 = vadd.f32 %v561, %v772
      %v774 = vpop.f32.mrb[0].mxu0
      %775 = vmatprep.mubr.bf16.mxu0 0
      %776 = vmatmul.mubr.bf16.gmra.mrb[0].mxu0 %v658
      %v777 = vpop.f32.mrb[0].mxu0
      %v778 = vadd.f32 %v566, %v777
      %v779 = vpop.f32.mrb[0].mxu0
      %v780 = vpop.f32.mrb[0].mxu0
      %v781 = vadd.f32 %v569, %v780
      %v782 = vpop.f32.mrb[0].mxu0
      %783 = vmatprep.mubr.bf16.mxu0 0
      %784 = vmatmul.mubr.bf16.gmra.mrb[0].mxu0 %v661
      %v785 = vpop.f32.mrb[0].mxu0
      %v786 = vadd.f32 %v574, %v785
      %v787 = vpop.f32.mrb[0].mxu0
      %v788 = vpop.f32.mrb[0].mxu0
      %v789 = vadd.f32 %v577, %v788
      %v790 = vpop.f32.mrb[0].mxu0
      %791 = vmatprep.mubr.bf16.mxu0 0
      %792 = vmatmul.mubr.bf16.gmra.mrb[0].mxu0 %v664
      %v793 = vpop.f32.mrb[0].mxu0
      %v794 = vadd.f32 %v582, %v793
      %v795 = vpop.f32.mrb[0].mxu0
      %v796 = vpop.f32.mrb[0].mxu0
      %v797 = vadd.f32 %v585, %v796
      %v798 = vpop.f32.mrb[0].mxu0
      %799 = vmatprep.mubr.bf16.mxu0 0
      %800 = vmatmul.mubr.bf16.gmra.mrb[0].mxu0 %v667
      %v801 = vpop.f32.mrb[0].mxu0
      %v802 = vadd.f32 %v590, %v801
      %v803 = vpop.f32.mrb[0].mxu0
      %v804 = vpop.f32.mrb[0].mxu0
      %v805 = vadd.f32 %v593, %v804
      %v806 = vpop.f32.mrb[0].mxu0
      %807 = vmatprep.mubr.bf16.mxu0 0
      %808 = vmatmul.mubr.bf16.gmra.mrb[0].mxu0 %v670
      %v809 = vpop.f32.mrb[0].mxu0
      %v810 = vadd.f32 %v598, %v809
      %v811 = vpop.f32.mrb[0].mxu0
      %v812 = vpop.f32.mrb[0].mxu0
      %v813 = vadd.f32 %v601, %v812
      %v814 = vpop.f32.mrb[0].mxu0
      %815 = vmatprep.mubr.bf16.mxu0 0
      %816 = vmatmul.mubr.bf16.gmra.mrb[0].mxu0 %v673
      %v817 = vpop.f32.mrb[0].mxu0
      %v818 = vadd.f32 %v606, %v817
      %v819 = vpop.f32.mrb[0].mxu0
      %v820 = vpop.f32.mrb[0].mxu0
      %v821 = vadd.f32 %v609, %v820
      %v822 = vpop.f32.mrb[0].mxu0
      %823 = vmatprep.mubr.bf16.mxu0 0
      %824 = vmatmul.mubr.bf16.gmra.mrb[0].mxu0 %v676
      %v825 = vpop.f32.mrb[0].mxu0
      %v826 = vadd.f32 %v614, %v825
      %v827 = vpop.f32.mrb[0].mxu0
      %v828 = vpop.f32.mrb[0].mxu0
      %v829 = vadd.f32 %v617, %v828
      %v830 = vpop.f32.mrb[0].mxu0
      %831 = vmatprep.mubr.bf16.mxu0 0
      %832 = vmatmul.mubr.bf16.gmra.mrb[0].mxu0 %v679
      %v833 = vpop.f32.mrb[0].mxu0
      %v834 = vadd.f32 %v622, %v833
      %v835 = vpop.f32.mrb[0].mxu0
      %v836 = vpop.f32.mrb[0].mxu0
      %v837 = vadd.f32 %v625, %v836
      %v838 = vpop.f32.mrb[0].mxu0
      %839 = vmatprep.mubr.bf16.mxu0 0
      %840 = vmatmul.mubr.bf16.gmra.mrb[0].mxu0 %v682
      %v841 = vpop.f32.mrb[0].mxu0
      %v842 = vadd.f32 %v630, %v841
      %v843 = vpop.f32.mrb[0].mxu0
      %v844 = vpop.f32.mrb[0].mxu0
      %v845 = vadd.f32 %v633, %v844
      %v846 = vpop.f32.mrb[0].mxu0
      %847 = vdwg.mxu0
      %vm848 = vcmask 1045504
      %v849 = vrot.slane %v172, 2
      %v850 = vrot.slane %v173, 2
      %v851 = vsel %vm848, %v849, %v850
      %v852 = vrot.slane %v174, 2
      %v853 = vsel %vm848, %v850, %v852
      %v854 = vrot.slane %v175, 2
      %v855 = vrot.slane %v176, 2
      %v856 = vsel %vm848, %v854, %v855
      %v857 = vrot.slane %v177, 2
      %v858 = vsel %vm848, %v855, %v857
      %v859 = vrot.slane %v178, 2
      %v860 = vrot.slane %v179, 2
      %v861 = vsel %vm848, %v859, %v860
      %v862 = vrot.slane %v180, 2
      %v863 = vsel %vm848, %v860, %v862
      %v864 = vrot.slane %v181, 2
      %v865 = vrot.slane %v182, 2
      %v866 = vsel %vm848, %v864, %v865
      %v867 = vrot.slane %v183, 2
      %v868 = vsel %vm848, %v865, %v867
      %v869 = vrot.slane %v184, 2
      %v870 = vrot.slane %v185, 2
      %v871 = vsel %vm848, %v869, %v870
      %v872 = vrot.slane %v186, 2
      %v873 = vsel %vm848, %v870, %v872
      %v874 = vrot.slane %v187, 2
      %v875 = vrot.slane %v188, 2
      %v876 = vsel %vm848, %v874, %v875
      %v877 = vrot.slane %v189, 2
      %v878 = vsel %vm848, %v875, %v877
      %v879 = vrot.slane %v190, 2
      %v880 = vrot.slane %v191, 2
      %v881 = vsel %vm848, %v879, %v880
      %v882 = vrot.slane %v192, 2
      %v883 = vsel %vm848, %v880, %v882
      %v884 = vrot.slane %v193, 2
      %v885 = vrot.slane %v194, 2
      %v886 = vsel %vm848, %v884, %v885
      %v887 = vrot.slane %v195, 2
      %v888 = vsel %vm848, %v885, %v887
      %v889 = vrot.slane %v196, 2
      %v890 = vrot.slane %v197, 2
      %v891 = vsel %vm848, %v889, %v890
      %v892 = vrot.slane %v198, 2
      %v893 = vsel %vm848, %v890, %v892
      %v894 = vrot.slane %v199, 2
      %v895 = vrot.slane %v200, 2
      %v896 = vsel %vm848, %v894, %v895
      %v897 = vrot.slane %v201, 2
      %v898 = vsel %vm848, %v895, %v897
      %v899 = vrot.slane %v202, 2
      %v900 = vrot.slane %v203, 2
      %v901 = vsel %vm848, %v899, %v900
      %v902 = vrot.slane %v204, 2
      %v903 = vsel %vm848, %v900, %v902
      %v904 = vrot.slane %v205, 2
      %v905 = vrot.slane %v206, 2
      %v906 = vsel %vm848, %v904, %v905
      %v907 = vrot.slane %v207, 2
      %v908 = vsel %vm848, %v905, %v907
      %v909 = vrot.slane %v208, 2
      %v910 = vrot.slane %v209, 2
      %v911 = vsel %vm848, %v909, %v910
      %v912 = vrot.slane %v210, 2
      %v913 = vsel %vm848, %v910, %v912
      %v914 = vrot.slane %v211, 2
      %v915 = vrot.slane %v212, 2
      %v916 = vsel %vm848, %v914, %v915
      %v917 = vrot.slane %v213, 2
      %v918 = vsel %vm848, %v915, %v917
      %v919 = vrot.slane %v214, 2
      %v920 = vrot.slane %v215, 2
      %v921 = vsel %vm848, %v919, %v920
      %v922 = vrot.slane %v216, 2
      %v923 = vsel %vm848, %v920, %v922
      %v924 = vrot.slane %v217, 2
      %v925 = vrot.slane %v218, 2
      %v926 = vsel %vm848, %v924, %v925
      %v927 = vrot.slane %v219, 2
      %v928 = vsel %vm848, %v925, %v927
      %v961 = vpack.c.bf16 %v853, %v851
      %v962 = vpack.c.bf16 %v858, %v856
      %v963 = vpack.c.bf16 %v863, %v861
      %v964 = vpack.c.bf16 %v868, %v866
      %v965 = vpack.c.bf16 %v873, %v871
      %v966 = vpack.c.bf16 %v878, %v876
      %v967 = vpack.c.bf16 %v883, %v881
      %v968 = vpack.c.bf16 %v888, %v886
      %v969 = vpack.c.bf16 %v893, %v891
      %v970 = vpack.c.bf16 %v898, %v896
      %v971 = vpack.c.bf16 %v903, %v901
      %v972 = vpack.c.bf16 %v908, %v906
      %v973 = vpack.c.bf16 %v913, %v911
      %v974 = vpack.c.bf16 %v918, %v916
      %v975 = vpack.c.bf16 %v923, %v921
      %v976 = vpack.c.bf16 %v928, %v926
      %s977 = scalar_lea.vmem %s1, 4
      %v978 = vld [vmem:[%s977] sm:$0x3]
      %v980 = vsel %vm422, %v961, 0
      %v983 = vsel %vm422, %v962, 0
      %v986 = vsel %vm422, %v963, 0
      %v989 = vsel %vm422, %v964, 0
      %v992 = vsel %vm422, %v965, 0
      %v995 = vsel %vm422, %v966, 0
      %v998 = vsel %vm422, %v967, 0
      %v1001 = vsel %vm422, %v968, 0
      %v1004 = vsel %vm422, %v969, 0
      %v1007 = vsel %vm422, %v970, 0
      %v1010 = vsel %vm422, %v971, 0
      %v1013 = vsel %vm422, %v972, 0
      %v1016 = vsel %vm422, %v973, 0
      %v1019 = vsel %vm422, %v974, 0
      %v1022 = vsel %vm422, %v975, 0
      %v1025 = vsel %vm422, %v976, 0
      %v1028 = vsel %vm471, %v978, 0
      %1030 = vmatprep.subr.bf16.mxu0 0
      %1031 = vmatpush1.bf16.msra.mxu0 %v1028
      %1032 = vmatprep.subr.bf16.mxu0 0
      %1033 = vmatpush1.bf16.msra.mxu0 0
      %1034 = vmatprep.subr.bf16.mxu0 0
      %1035 = vmatpush1.bf16.msra.mxu0 0
      %1036 = vmatprep.subr.bf16.mxu0 0
      %1037 = vmatpush1.bf16.msra.mxu0 0
      %1038 = vmatprep.subr.bf16.mxu0 0
      %1039 = vmatpush1.bf16.msra.mxu0 0
      %1040 = vmatprep.subr.bf16.mxu0 0
      %1041 = vmatpush1.bf16.msra.mxu0 0
      %1042 = vmatprep.subr.bf16.mxu0 0
      %1043 = vmatpush1.bf16.msra.mxu0 0
      %1044 = vmatprep.subr.bf16.mxu0 0
      %1045 = vmatpush1.bf16.msra.mxu0 0
      %1046 = vmatprep.subr.bf16.mxu0 0
      %1047 = vmatpush1.bf16.msra.mxu0 0
      %1048 = vmatprep.subr.bf16.mxu0 0
      %1049 = vmatpush1.bf16.msra.mxu0 0
      %1050 = vmatprep.subr.bf16.mxu0 0
      %1051 = vmatpush1.bf16.msra.mxu0 0
      %1052 = vmatprep.subr.bf16.mxu0 0
      %1053 = vmatpush1.bf16.msra.mxu0 0
      %1054 = vmatprep.subr.bf16.mxu0 0
      %1055 = vmatpush1.bf16.msra.mxu0 0
      %1056 = vmatprep.subr.bf16.mxu0 0
      %1057 = vmatpush1.bf16.msra.mxu0 0
      %1058 = vmatprep.subr.bf16.mxu0 0
      %1059 = vmatpush1.bf16.msra.mxu0 0
      %1060 = vmatprep.subr.bf16.mxu0 0
      %1061 = vmatpush1.bf16.msra.mxu0 0
      %1062 = vmatprep.mubr.bf16.mxu0 0
      %1063 = vmatmul.mubr.bf16.gmra.mrb[0].mxu0 %v980
      %v1064 = vpop.f32.mrb[0].mxu0
      %v1065 = vadd.f32 0.0, %v1064
      %v1066 = vpop.f32.mrb[0].mxu0
      %v1067 = vpop.f32.mrb[0].mxu0
      %v1068 = vadd.f32 0.0, %v1067
      %v1069 = vpop.f32.mrb[0].mxu0
      %1070 = vmatprep.mubr.bf16.mxu0 0
      %1071 = vmatmul.mubr.bf16.gmra.mrb[0].mxu0 %v983
      %v1072 = vpop.f32.mrb[0].mxu0
      %v1073 = vadd.f32 0.0, %v1072
      %v1074 = vpop.f32.mrb[0].mxu0
      %v1075 = vpop.f32.mrb[0].mxu0
      %v1076 = vadd.f32 0.0, %v1075
      %v1077 = vpop.f32.mrb[0].mxu0
      %1078 = vmatprep.mubr.bf16.mxu0 0
      %1079 = vmatmul.mubr.bf16.gmra.mrb[0].mxu0 %v986
      %v1080 = vpop.f32.mrb[0].mxu0
      %v1081 = vadd.f32 0.0, %v1080
      %v1082 = vpop.f32.mrb[0].mxu0
      %v1083 = vpop.f32.mrb[0].mxu0
      %v1084 = vadd.f32 0.0, %v1083
      %v1085 = vpop.f32.mrb[0].mxu0
      %1086 = vmatprep.mubr.bf16.mxu0 0
      %1087 = vmatmul.mubr.bf16.gmra.mrb[0].mxu0 %v989
      %v1088 = vpop.f32.mrb[0].mxu0
      %v1089 = vadd.f32 0.0, %v1088
      %v1090 = vpop.f32.mrb[0].mxu0
      %v1091 = vpop.f32.mrb[0].mxu0
      %v1092 = vadd.f32 0.0, %v1091
      %v1093 = vpop.f32.mrb[0].mxu0
      %1094 = vmatprep.mubr.bf16.mxu0 0
      %1095 = vmatmul.mubr.bf16.gmra.mrb[0].mxu0 %v992
      %v1096 = vpop.f32.mrb[0].mxu0
      %v1097 = vadd.f32 0.0, %v1096
      %v1098 = vpop.f32.mrb[0].mxu0
      %v1099 = vpop.f32.mrb[0].mxu0
      %v1100 = vadd.f32 0.0, %v1099
      %v1101 = vpop.f32.mrb[0].mxu0
      %1102 = vmatprep.mubr.bf16.mxu0 0
      %1103 = vmatmul.mubr.bf16.gmra.mrb[0].mxu0 %v995
      %v1104 = vpop.f32.mrb[0].mxu0
      %v1105 = vadd.f32 0.0, %v1104
      %v1106 = vpop.f32.mrb[0].mxu0
      %v1107 = vpop.f32.mrb[0].mxu0
      %v1108 = vadd.f32 0.0, %v1107
      %v1109 = vpop.f32.mrb[0].mxu0
      %1110 = vmatprep.mubr.bf16.mxu0 0
      %1111 = vmatmul.mubr.bf16.gmra.mrb[0].mxu0 %v998
      %v1112 = vpop.f32.mrb[0].mxu0
      %v1113 = vadd.f32 0.0, %v1112
      %v1114 = vpop.f32.mrb[0].mxu0
      %v1115 = vpop.f32.mrb[0].mxu0
      %v1116 = vadd.f32 0.0, %v1115
      %v1117 = vpop.f32.mrb[0].mxu0
      %1118 = vmatprep.mubr.bf16.mxu0 0
      %1119 = vmatmul.mubr.bf16.gmra.mrb[0].mxu0 %v1001
      %v1120 = vpop.f32.mrb[0].mxu0
      %v1121 = vadd.f32 0.0, %v1120
      %v1122 = vpop.f32.mrb[0].mxu0
      %v1123 = vpop.f32.mrb[0].mxu0
      %v1124 = vadd.f32 0.0, %v1123
      %v1125 = vpop.f32.mrb[0].mxu0
      %1126 = vmatprep.mubr.bf16.mxu0 0
      %1127 = vmatmul.mubr.bf16.gmra.mrb[0].mxu0 %v1004
      %v1128 = vpop.f32.mrb[0].mxu0
      %v1129 = vadd.f32 0.0, %v1128
      %v1130 = vpop.f32.mrb[0].mxu0
      %v1131 = vpop.f32.mrb[0].mxu0
      %v1132 = vadd.f32 0.0, %v1131
      %v1133 = vpop.f32.mrb[0].mxu0
      %1134 = vmatprep.mubr.bf16.mxu0 0
      %1135 = vmatmul.mubr.bf16.gmra.mrb[0].mxu0 %v1007
      %v1136 = vpop.f32.mrb[0].mxu0
      %v1137 = vadd.f32 0.0, %v1136
      %v1138 = vpop.f32.mrb[0].mxu0
      %v1139 = vpop.f32.mrb[0].mxu0
      %v1140 = vadd.f32 0.0, %v1139
      %v1141 = vpop.f32.mrb[0].mxu0
      %1142 = vmatprep.mubr.bf16.mxu0 0
      %1143 = vmatmul.mubr.bf16.gmra.mrb[0].mxu0 %v1010
      %v1144 = vpop.f32.mrb[0].mxu0
      %v1145 = vadd.f32 0.0, %v1144
      %v1146 = vpop.f32.mrb[0].mxu0
      %v1147 = vpop.f32.mrb[0].mxu0
      %v1148 = vadd.f32 0.0, %v1147
      %v1149 = vpop.f32.mrb[0].mxu0
      %1150 = vmatprep.mubr.bf16.mxu0 0
      %1151 = vmatmul.mubr.bf16.gmra.mrb[0].mxu0 %v1013
      %v1152 = vpop.f32.mrb[0].mxu0
      %v1153 = vadd.f32 0.0, %v1152
      %v1154 = vpop.f32.mrb[0].mxu0
      %v1155 = vpop.f32.mrb[0].mxu0
      %v1156 = vadd.f32 0.0, %v1155
      %v1157 = vpop.f32.mrb[0].mxu0
      %1158 = vmatprep.mubr.bf16.mxu0 0
      %1159 = vmatmul.mubr.bf16.gmra.mrb[0].mxu0 %v1016
      %v1160 = vpop.f32.mrb[0].mxu0
      %v1161 = vadd.f32 0.0, %v1160
      %v1162 = vpop.f32.mrb[0].mxu0
      %v1163 = vpop.f32.mrb[0].mxu0
      %v1164 = vadd.f32 0.0, %v1163
      %v1165 = vpop.f32.mrb[0].mxu0
      %1166 = vmatprep.mubr.bf16.mxu0 0
      %1167 = vmatmul.mubr.bf16.gmra.mrb[0].mxu0 %v1019
      %v1168 = vpop.f32.mrb[0].mxu0
      %v1169 = vadd.f32 0.0, %v1168
      %v1170 = vpop.f32.mrb[0].mxu0
      %v1171 = vpop.f32.mrb[0].mxu0
      %v1172 = vadd.f32 0.0, %v1171
      %v1173 = vpop.f32.mrb[0].mxu0
      %1174 = vmatprep.mubr.bf16.mxu0 0
      %1175 = vmatmul.mubr.bf16.gmra.mrb[0].mxu0 %v1022
      %v1176 = vpop.f32.mrb[0].mxu0
      %v1177 = vadd.f32 0.0, %v1176
      %v1178 = vpop.f32.mrb[0].mxu0
      %v1179 = vpop.f32.mrb[0].mxu0
      %v1180 = vadd.f32 0.0, %v1179
      %v1181 = vpop.f32.mrb[0].mxu0
      %1182 = vmatprep.mubr.bf16.mxu0 0
      %1183 = vmatmul.mubr.bf16.gmra.mrb[0].mxu0 %v1025
      %v1184 = vpop.f32.mrb[0].mxu0
      %v1185 = vadd.f32 0.0, %v1184
      %v1186 = vpop.f32.mrb[0].mxu0
      %v1187 = vpop.f32.mrb[0].mxu0
      %v1188 = vadd.f32 0.0, %v1187
      %v1189 = vpop.f32.mrb[0].mxu0
      %1190 = vdwg.mxu0
      %v1191 = vadd.f32 %v722, %v1065
      %v1192 = vadd.f32 %v725, %v1068
      %v1193 = vadd.f32 %v730, %v1073
      %v1194 = vadd.f32 %v733, %v1076
      %v1195 = vadd.f32 %v738, %v1081
      %v1196 = vadd.f32 %v741, %v1084
      %v1197 = vadd.f32 %v746, %v1089
      %v1198 = vadd.f32 %v749, %v1092
      %v1199 = vadd.f32 %v754, %v1097
      %v1200 = vadd.f32 %v757, %v1100
      %v1201 = vadd.f32 %v762, %v1105
      %v1202 = vadd.f32 %v765, %v1108
      %v1203 = vadd.f32 %v770, %v1113
      %v1204 = vadd.f32 %v773, %v1116
      %v1205 = vadd.f32 %v778, %v1121
      %v1206 = vadd.f32 %v781, %v1124
      %v1207 = vadd.f32 %v786, %v1129
      %v1208 = vadd.f32 %v789, %v1132
      %v1209 = vadd.f32 %v794, %v1137
      %v1210 = vadd.f32 %v797, %v1140
      %v1211 = vadd.f32 %v802, %v1145
      %v1212 = vadd.f32 %v805, %v1148
      %v1213 = vadd.f32 %v810, %v1153
      %v1214 = vadd.f32 %v813, %v1156
      %v1215 = vadd.f32 %v818, %v1161
      %v1216 = vadd.f32 %v821, %v1164
      %v1217 = vadd.f32 %v826, %v1169
      %v1218 = vadd.f32 %v829, %v1172
      %v1219 = vadd.f32 %v834, %v1177
      %v1220 = vadd.f32 %v837, %v1180
      %v1221 = vadd.f32 %v842, %v1185
      %v1222 = vadd.f32 %v845, %v1188
      %v1223 = vpack.c.bf16 %v221, %v220
      %s1224 = scalar_lea.vmem %s1, 6
      %v1225 = vld [vmem:[%s1224] sm:$0x3]
      %v1227 = vsel %vm422, %v1223, 0
      %v1230 = vsel %vm471, %v1225, 0
      %1232 = vmatprep.subr.bf16.mxu0 0
      %1233 = vmatpush1.bf16.msra.mxu0 %v1230
      %1234 = vmatprep.subr.bf16.mxu0 0
      %1235 = vmatpush1.bf16.msra.mxu0 0
      %1236 = vmatprep.subr.bf16.mxu0 0
      %1237 = vmatpush1.bf16.msra.mxu0 0
      %1238 = vmatprep.subr.bf16.mxu0 0
      %1239 = vmatpush1.bf16.msra.mxu0 0
      %1240 = vmatprep.subr.bf16.mxu0 0
      %1241 = vmatpush1.bf16.msra.mxu0 0
      %1242 = vmatprep.subr.bf16.mxu0 0
      %1243 = vmatpush1.bf16.msra.mxu0 0
      %1244 = vmatprep.subr.bf16.mxu0 0
      %1245 = vmatpush1.bf16.msra.mxu0 0
      %1246 = vmatprep.subr.bf16.mxu0 0
      %1247 = vmatpush1.bf16.msra.mxu0 0
      %1248 = vmatprep.subr.bf16.mxu0 0
      %1249 = vmatpush1.bf16.msra.mxu0 0
      %1250 = vmatprep.subr.bf16.mxu0 0
      %1251 = vmatpush1.bf16.msra.mxu0 0
      %1252 = vmatprep.subr.bf16.mxu0 0
      %1253 = vmatpush1.bf16.msra.mxu0 0
      %1254 = vmatprep.subr.bf16.mxu0 0
      %1255 = vmatpush1.bf16.msra.mxu0 0
      %1256 = vmatprep.subr.bf16.mxu0 0
      %1257 = vmatpush1.bf16.msra.mxu0 0
      %1258 = vmatprep.subr.bf16.mxu0 0
      %1259 = vmatpush1.bf16.msra.mxu0 0
      %1260 = vmatprep.subr.bf16.mxu0 0
      %1261 = vmatpush1.bf16.msra.mxu0 0
      %1262 = vmatprep.subr.bf16.mxu0 0
      %1263 = vmatpush1.bf16.msra.mxu0 0
      %1264 = vmatprep.mubr.bf16.mxu0 0
      %1265 = vmatmul.mubr.bf16.gmra.mrb[0].mxu0 %v640
      %v1266 = vpop.f32.mrb[0].mxu0
      %v1267 = vadd.f32 0.0, %v1266
      %v1268 = vpop.f32.mrb[0].mxu0
      %v1269 = vpop.f32.mrb[0].mxu0
      %v1270 = vadd.f32 0.0, %v1269
      %v1271 = vpop.f32.mrb[0].mxu0
      %1272 = vmatprep.mubr.bf16.mxu0 0
      %1273 = vmatmul.mubr.bf16.gmra.mrb[0].mxu0 %v643
      %v1274 = vpop.f32.mrb[0].mxu0
      %v1275 = vadd.f32 0.0, %v1274
      %v1276 = vpop.f32.mrb[0].mxu0
      %v1277 = vpop.f32.mrb[0].mxu0
      %v1278 = vadd.f32 0.0, %v1277
      %v1279 = vpop.f32.mrb[0].mxu0
      %1280 = vmatprep.mubr.bf16.mxu0 0
      %1281 = vmatmul.mubr.bf16.gmra.mrb[0].mxu0 %v646
      %v1282 = vpop.f32.mrb[0].mxu0
      %v1283 = vadd.f32 0.0, %v1282
      %v1284 = vpop.f32.mrb[0].mxu0
      %v1285 = vpop.f32.mrb[0].mxu0
      %v1286 = vadd.f32 0.0, %v1285
      %v1287 = vpop.f32.mrb[0].mxu0
      %1288 = vmatprep.mubr.bf16.mxu0 0
      %1289 = vmatmul.mubr.bf16.gmra.mrb[0].mxu0 %v649
      %v1290 = vpop.f32.mrb[0].mxu0
      %v1291 = vadd.f32 0.0, %v1290
      %v1292 = vpop.f32.mrb[0].mxu0
      %v1293 = vpop.f32.mrb[0].mxu0
      %v1294 = vadd.f32 0.0, %v1293
      %v1295 = vpop.f32.mrb[0].mxu0
      %1296 = vmatprep.mubr.bf16.mxu0 0
      %1297 = vmatmul.mubr.bf16.gmra.mrb[0].mxu0 %v652
      %v1298 = vpop.f32.mrb[0].mxu0
      %v1299 = vadd.f32 0.0, %v1298
      %v1300 = vpop.f32.mrb[0].mxu0
      %v1301 = vpop.f32.mrb[0].mxu0
      %v1302 = vadd.f32 0.0, %v1301
      %v1303 = vpop.f32.mrb[0].mxu0
      %1304 = vmatprep.mubr.bf16.mxu0 0
      %1305 = vmatmul.mubr.bf16.gmra.mrb[0].mxu0 %v655
      %v1306 = vpop.f32.mrb[0].mxu0
      %v1307 = vadd.f32 0.0, %v1306
      %v1308 = vpop.f32.mrb[0].mxu0
      %v1309 = vpop.f32.mrb[0].mxu0
      %v1310 = vadd.f32 0.0, %v1309
      %v1311 = vpop.f32.mrb[0].mxu0
      %1312 = vmatprep.mubr.bf16.mxu0 0
      %1313 = vmatmul.mubr.bf16.gmra.mrb[0].mxu0 %v658
      %v1314 = vpop.f32.mrb[0].mxu0
      %v1315 = vadd.f32 0.0, %v1314
      %v1316 = vpop.f32.mrb[0].mxu0
      %v1317 = vpop.f32.mrb[0].mxu0
      %v1318 = vadd.f32 0.0, %v1317
      %v1319 = vpop.f32.mrb[0].mxu0
      %1320 = vmatprep.mubr.bf16.mxu0 0
      %1321 = vmatmul.mubr.bf16.gmra.mrb[0].mxu0 %v661
      %v1322 = vpop.f32.mrb[0].mxu0
      %v1323 = vadd.f32 0.0, %v1322
      %v1324 = vpop.f32.mrb[0].mxu0
      %v1325 = vpop.f32.mrb[0].mxu0
      %v1326 = vadd.f32 0.0, %v1325
      %v1327 = vpop.f32.mrb[0].mxu0
      %1328 = vmatprep.mubr.bf16.mxu0 0
      %1329 = vmatmul.mubr.bf16.gmra.mrb[0].mxu0 %v664
      %v1330 = vpop.f32.mrb[0].mxu0
      %v1331 = vadd.f32 0.0, %v1330
      %v1332 = vpop.f32.mrb[0].mxu0
      %v1333 = vpop.f32.mrb[0].mxu0
      %v1334 = vadd.f32 0.0, %v1333
      %v1335 = vpop.f32.mrb[0].mxu0
      %1336 = vmatprep.mubr.bf16.mxu0 0
      %1337 = vmatmul.mubr.bf16.gmra.mrb[0].mxu0 %v667
      %v1338 = vpop.f32.mrb[0].mxu0
      %v1339 = vadd.f32 0.0, %v1338
      %v1340 = vpop.f32.mrb[0].mxu0
      %v1341 = vpop.f32.mrb[0].mxu0
      %v1342 = vadd.f32 0.0, %v1341
      %v1343 = vpop.f32.mrb[0].mxu0
      %1344 = vmatprep.mubr.bf16.mxu0 0
      %1345 = vmatmul.mubr.bf16.gmra.mrb[0].mxu0 %v670
      %v1346 = vpop.f32.mrb[0].mxu0
      %v1347 = vadd.f32 0.0, %v1346
      %v1348 = vpop.f32.mrb[0].mxu0
      %v1349 = vpop.f32.mrb[0].mxu0
      %v1350 = vadd.f32 0.0, %v1349
      %v1351 = vpop.f32.mrb[0].mxu0
      %1352 = vmatprep.mubr.bf16.mxu0 0
      %1353 = vmatmul.mubr.bf16.gmra.mrb[0].mxu0 %v673
      %v1354 = vpop.f32.mrb[0].mxu0
      %v1355 = vadd.f32 0.0, %v1354
      %v1356 = vpop.f32.mrb[0].mxu0
      %v1357 = vpop.f32.mrb[0].mxu0
      %v1358 = vadd.f32 0.0, %v1357
      %v1359 = vpop.f32.mrb[0].mxu0
      %1360 = vmatprep.mubr.bf16.mxu0 0
      %1361 = vmatmul.mubr.bf16.gmra.mrb[0].mxu0 %v676
      %v1362 = vpop.f32.mrb[0].mxu0
      %v1363 = vadd.f32 0.0, %v1362
      %v1364 = vpop.f32.mrb[0].mxu0
      %v1365 = vpop.f32.mrb[0].mxu0
      %v1366 = vadd.f32 0.0, %v1365
      %v1367 = vpop.f32.mrb[0].mxu0
      %1368 = vmatprep.mubr.bf16.mxu0 0
      %1369 = vmatmul.mubr.bf16.gmra.mrb[0].mxu0 %v679
      %v1370 = vpop.f32.mrb[0].mxu0
      %v1371 = vadd.f32 0.0, %v1370
      %v1372 = vpop.f32.mrb[0].mxu0
      %v1373 = vpop.f32.mrb[0].mxu0
      %v1374 = vadd.f32 0.0, %v1373
      %v1375 = vpop.f32.mrb[0].mxu0
      %1376 = vmatprep.mubr.bf16.mxu0 0
      %1377 = vmatmul.mubr.bf16.gmra.mrb[0].mxu0 %v682
      %v1378 = vpop.f32.mrb[0].mxu0
      %v1379 = vadd.f32 0.0, %v1378
      %v1380 = vpop.f32.mrb[0].mxu0
      %v1381 = vpop.f32.mrb[0].mxu0
      %v1382 = vadd.f32 0.0, %v1381
      %v1383 = vpop.f32.mrb[0].mxu0
      %1384 = vmatprep.mubr.bf16.mxu0 0
      %1385 = vmatmul.mubr.bf16.gmra.mrb[0].mxu0 %v1227
      %v1386 = vpop.f32.mrb[0].mxu0
      %v1387 = vadd.f32 0.0, %v1386
      %v1388 = vpop.f32.mrb[0].mxu0
      %v1389 = vpop.f32.mrb[0].mxu0
      %v1390 = vadd.f32 0.0, %v1389
      %v1391 = vpop.f32.mrb[0].mxu0
      %1392 = vdwg.mxu0
      %v1393 = vadd.f32 %v1191, %v1267
      %v1394 = vadd.f32 %v1192, %v1270
      %v1395 = vadd.f32 %v1193, %v1275
      %v1396 = vadd.f32 %v1194, %v1278
      %v1397 = vadd.f32 %v1195, %v1283
      %v1398 = vadd.f32 %v1196, %v1286
      %v1399 = vadd.f32 %v1197, %v1291
      %v1400 = vadd.f32 %v1198, %v1294
      %v1401 = vadd.f32 %v1199, %v1299
      %v1402 = vadd.f32 %v1200, %v1302
      %v1403 = vadd.f32 %v1201, %v1307
      %v1404 = vadd.f32 %v1202, %v1310
      %v1405 = vadd.f32 %v1203, %v1315
      %v1406 = vadd.f32 %v1204, %v1318
      %v1407 = vadd.f32 %v1205, %v1323
      %v1408 = vadd.f32 %v1206, %v1326
      %v1409 = vadd.f32 %v1207, %v1331
      %v1410 = vadd.f32 %v1208, %v1334
      %v1411 = vadd.f32 %v1209, %v1339
      %v1412 = vadd.f32 %v1210, %v1342
      %v1413 = vadd.f32 %v1211, %v1347
      %v1414 = vadd.f32 %v1212, %v1350
      %v1415 = vadd.f32 %v1213, %v1355
      %v1416 = vadd.f32 %v1214, %v1358
      %v1417 = vadd.f32 %v1215, %v1363
      %v1418 = vadd.f32 %v1216, %v1366
      %v1419 = vadd.f32 %v1217, %v1371
      %v1420 = vadd.f32 %v1218, %v1374
      %v1421 = vadd.f32 %v1219, %v1379
      %v1422 = vadd.f32 %v1220, %v1382
      %v1423 = vadd.f32 %v1221, %v1387
      %v1424 = vadd.f32 %v1222, %v1390
      %v1428 = vrot.slane %v220, 1
      %v1429 = vrot.slane %v221, 1
      %v1430 = vsel %vm291, %v1428, %v1429
      %v1431 = vrot.slane %v222, 1
      %v1432 = vsel %vm291, %v1429, %v1431
      %v1435 = vpack.c.bf16 %v1432, %v1430
      %s1436 = scalar_lea.vmem %s1, 8
      %v1437 = vld [vmem:[%s1436] sm:$0x3]
      %v1439 = vsel %vm422, %v1435, 0
      %v1442 = vsel %vm471, %v1437, 0
      %1444 = vmatprep.subr.bf16.mxu0 0
      %1445 = vmatpush1.bf16.msra.mxu0 %v1442
      %1446 = vmatprep.subr.bf16.mxu0 0
      %1447 = vmatpush1.bf16.msra.mxu0 0
      %1448 = vmatprep.subr.bf16.mxu0 0
      %1449 = vmatpush1.bf16.msra.mxu0 0
      %1450 = vmatprep.subr.bf16.mxu0 0
      %1451 = vmatpush1.bf16.msra.mxu0 0
      %1452 = vmatprep.subr.bf16.mxu0 0
      %1453 = vmatpush1.bf16.msra.mxu0 0
      %1454 = vmatprep.subr.bf16.mxu0 0
      %1455 = vmatpush1.bf16.msra.mxu0 0
      %1456 = vmatprep.subr.bf16.mxu0 0
      %1457 = vmatpush1.bf16.msra.mxu0 0
      %1458 = vmatprep.subr.bf16.mxu0 0
      %1459 = vmatpush1.bf16.msra.mxu0 0
      %1460 = vmatprep.subr.bf16.mxu0 0
      %1461 = vmatpush1.bf16.msra.mxu0 0
      %1462 = vmatprep.subr.bf16.mxu0 0
      %1463 = vmatpush1.bf16.msra.mxu0 0
      %1464 = vmatprep.subr.bf16.mxu0 0
      %1465 = vmatpush1.bf16.msra.mxu0 0
      %1466 = vmatprep.subr.bf16.mxu0 0
      %1467 = vmatpush1.bf16.msra.mxu0 0
      %1468 = vmatprep.subr.bf16.mxu0 0
      %1469 = vmatpush1.bf16.msra.mxu0 0
      %1470 = vmatprep.subr.bf16.mxu0 0
      %1471 = vmatpush1.bf16.msra.mxu0 0
      %1472 = vmatprep.subr.bf16.mxu0 0
      %1473 = vmatpush1.bf16.msra.mxu0 0
      %1474 = vmatprep.subr.bf16.mxu0 0
      %1475 = vmatpush1.bf16.msra.mxu0 0
      %1476 = vmatprep.mubr.bf16.mxu0 0
      %1477 = vmatmul.mubr.bf16.gmra.mrb[0].mxu0 %v427
      %v1478 = vpop.f32.mrb[0].mxu0
      %v1479 = vadd.f32 0.0, %v1478
      %v1480 = vpop.f32.mrb[0].mxu0
      %v1481 = vpop.f32.mrb[0].mxu0
      %v1482 = vadd.f32 0.0, %v1481
      %v1483 = vpop.f32.mrb[0].mxu0
      %1484 = vmatprep.mubr.bf16.mxu0 0
      %1485 = vmatmul.mubr.bf16.gmra.mrb[0].mxu0 %v430
      %v1486 = vpop.f32.mrb[0].mxu0
      %v1487 = vadd.f32 0.0, %v1486
      %v1488 = vpop.f32.mrb[0].mxu0
      %v1489 = vpop.f32.mrb[0].mxu0
      %v1490 = vadd.f32 0.0, %v1489
      %v1491 = vpop.f32.mrb[0].mxu0
      %1492 = vmatprep.mubr.bf16.mxu0 0
      %1493 = vmatmul.mubr.bf16.gmra.mrb[0].mxu0 %v433
      %v1494 = vpop.f32.mrb[0].mxu0
      %v1495 = vadd.f32 0.0, %v1494
      %v1496 = vpop.f32.mrb[0].mxu0
      %v1497 = vpop.f32.mrb[0].mxu0
      %v1498 = vadd.f32 0.0, %v1497
      %v1499 = vpop.f32.mrb[0].mxu0
      %1500 = vmatprep.mubr.bf16.mxu0 0
      %1501 = vmatmul.mubr.bf16.gmra.mrb[0].mxu0 %v436
      %v1502 = vpop.f32.mrb[0].mxu0
      %v1503 = vadd.f32 0.0, %v1502
      %v1504 = vpop.f32.mrb[0].mxu0
      %v1505 = vpop.f32.mrb[0].mxu0
      %v1506 = vadd.f32 0.0, %v1505
      %v1507 = vpop.f32.mrb[0].mxu0
      %1508 = vmatprep.mubr.bf16.mxu0 0
      %1509 = vmatmul.mubr.bf16.gmra.mrb[0].mxu0 %v439
      %v1510 = vpop.f32.mrb[0].mxu0
      %v1511 = vadd.f32 0.0, %v1510
      %v1512 = vpop.f32.mrb[0].mxu0
      %v1513 = vpop.f32.mrb[0].mxu0
      %v1514 = vadd.f32 0.0, %v1513
      %v1515 = vpop.f32.mrb[0].mxu0
      %1516 = vmatprep.mubr.bf16.mxu0 0
      %1517 = vmatmul.mubr.bf16.gmra.mrb[0].mxu0 %v442
      %v1518 = vpop.f32.mrb[0].mxu0
      %v1519 = vadd.f32 0.0, %v1518
      %v1520 = vpop.f32.mrb[0].mxu0
      %v1521 = vpop.f32.mrb[0].mxu0
      %v1522 = vadd.f32 0.0, %v1521
      %v1523 = vpop.f32.mrb[0].mxu0
      %1524 = vmatprep.mubr.bf16.mxu0 0
      %1525 = vmatmul.mubr.bf16.gmra.mrb[0].mxu0 %v445
      %v1526 = vpop.f32.mrb[0].mxu0
      %v1527 = vadd.f32 0.0, %v1526
      %v1528 = vpop.f32.mrb[0].mxu0
      %v1529 = vpop.f32.mrb[0].mxu0
      %v1530 = vadd.f32 0.0, %v1529
      %v1531 = vpop.f32.mrb[0].mxu0
      %1532 = vmatprep.mubr.bf16.mxu0 0
      %1533 = vmatmul.mubr.bf16.gmra.mrb[0].mxu0 %v448
      %v1534 = vpop.f32.mrb[0].mxu0
      %v1535 = vadd.f32 0.0, %v1534
      %v1536 = vpop.f32.mrb[0].mxu0
      %v1537 = vpop.f32.mrb[0].mxu0
      %v1538 = vadd.f32 0.0, %v1537
      %v1539 = vpop.f32.mrb[0].mxu0
      %1540 = vmatprep.mubr.bf16.mxu0 0
      %1541 = vmatmul.mubr.bf16.gmra.mrb[0].mxu0 %v451
      %v1542 = vpop.f32.mrb[0].mxu0
      %v1543 = vadd.f32 0.0, %v1542
      %v1544 = vpop.f32.mrb[0].mxu0
      %v1545 = vpop.f32.mrb[0].mxu0
      %v1546 = vadd.f32 0.0, %v1545
      %v1547 = vpop.f32.mrb[0].mxu0
      %1548 = vmatprep.mubr.bf16.mxu0 0
      %1549 = vmatmul.mubr.bf16.gmra.mrb[0].mxu0 %v454
      %v1550 = vpop.f32.mrb[0].mxu0
      %v1551 = vadd.f32 0.0, %v1550
      %v1552 = vpop.f32.mrb[0].mxu0
      %v1553 = vpop.f32.mrb[0].mxu0
      %v1554 = vadd.f32 0.0, %v1553
      %v1555 = vpop.f32.mrb[0].mxu0
      %1556 = vmatprep.mubr.bf16.mxu0 0
      %1557 = vmatmul.mubr.bf16.gmra.mrb[0].mxu0 %v457
      %v1558 = vpop.f32.mrb[0].mxu0
      %v1559 = vadd.f32 0.0, %v1558
      %v1560 = vpop.f32.mrb[0].mxu0
      %v1561 = vpop.f32.mrb[0].mxu0
      %v1562 = vadd.f32 0.0, %v1561
      %v1563 = vpop.f32.mrb[0].mxu0
      %1564 = vmatprep.mubr.bf16.mxu0 0
      %1565 = vmatmul.mubr.bf16.gmra.mrb[0].mxu0 %v460
      %v1566 = vpop.f32.mrb[0].mxu0
      %v1567 = vadd.f32 0.0, %v1566
      %v1568 = vpop.f32.mrb[0].mxu0
      %v1569 = vpop.f32.mrb[0].mxu0
      %v1570 = vadd.f32 0.0, %v1569
      %v1571 = vpop.f32.mrb[0].mxu0
      %1572 = vmatprep.mubr.bf16.mxu0 0
      %1573 = vmatmul.mubr.bf16.gmra.mrb[0].mxu0 %v463
      %v1574 = vpop.f32.mrb[0].mxu0
      %v1575 = vadd.f32 0.0, %v1574
      %v1576 = vpop.f32.mrb[0].mxu0
      %v1577 = vpop.f32.mrb[0].mxu0
      %v1578 = vadd.f32 0.0, %v1577
      %v1579 = vpop.f32.mrb[0].mxu0
      %1580 = vmatprep.mubr.bf16.mxu0 0
      %1581 = vmatmul.mubr.bf16.gmra.mrb[0].mxu0 %v466
      %v1582 = vpop.f32.mrb[0].mxu0
      %v1583 = vadd.f32 0.0, %v1582
      %v1584 = vpop.f32.mrb[0].mxu0
      %v1585 = vpop.f32.mrb[0].mxu0
      %v1586 = vadd.f32 0.0, %v1585
      %v1587 = vpop.f32.mrb[0].mxu0
      %1588 = vmatprep.mubr.bf16.mxu0 0
      %1589 = vmatmul.mubr.bf16.gmra.mrb[0].mxu0 %v469
      %v1590 = vpop.f32.mrb[0].mxu0
      %v1591 = vadd.f32 0.0, %v1590
      %v1592 = vpop.f32.mrb[0].mxu0
      %v1593 = vpop.f32.mrb[0].mxu0
      %v1594 = vadd.f32 0.0, %v1593
      %v1595 = vpop.f32.mrb[0].mxu0
      %1596 = vmatprep.mubr.bf16.mxu0 0
      %1597 = vmatmul.mubr.bf16.gmra.mrb[0].mxu0 %v1439
      %v1598 = vpop.f32.mrb[0].mxu0
      %v1599 = vadd.f32 0.0, %v1598
      %v1600 = vpop.f32.mrb[0].mxu0
      %v1601 = vpop.f32.mrb[0].mxu0
      %v1602 = vadd.f32 0.0, %v1601
      %v1603 = vpop.f32.mrb[0].mxu0
      %1604 = vdwg.mxu0
      %v1605 = vadd.f32 %v1393, %v1479
      %v1606 = vadd.f32 %v1394, %v1482
      %v1607 = vadd.f32 %v1395, %v1487
      %v1608 = vadd.f32 %v1396, %v1490
      %v1609 = vadd.f32 %v1397, %v1495
      %v1610 = vadd.f32 %v1398, %v1498
      %v1611 = vadd.f32 %v1399, %v1503
      %v1612 = vadd.f32 %v1400, %v1506
      %v1613 = vadd.f32 %v1401, %v1511
      %v1614 = vadd.f32 %v1402, %v1514
      %v1615 = vadd.f32 %v1403, %v1519
      %v1616 = vadd.f32 %v1404, %v1522
      %v1617 = vadd.f32 %v1405, %v1527
      %v1618 = vadd.f32 %v1406, %v1530
      %v1619 = vadd.f32 %v1407, %v1535
      %v1620 = vadd.f32 %v1408, %v1538
      %v1621 = vadd.f32 %v1409, %v1543
      %v1622 = vadd.f32 %v1410, %v1546
      %v1623 = vadd.f32 %v1411, %v1551
      %v1624 = vadd.f32 %v1412, %v1554
      %v1625 = vadd.f32 %v1413, %v1559
      %v1626 = vadd.f32 %v1414, %v1562
      %v1627 = vadd.f32 %v1415, %v1567
      %v1628 = vadd.f32 %v1416, %v1570
      %v1629 = vadd.f32 %v1417, %v1575
      %v1630 = vadd.f32 %v1418, %v1578
      %v1631 = vadd.f32 %v1419, %v1583
      %v1632 = vadd.f32 %v1420, %v1586
      %v1633 = vadd.f32 %v1421, %v1591
      %v1634 = vadd.f32 %v1422, %v1594
      %v1635 = vadd.f32 %v1423, %v1599
      %v1636 = vadd.f32 %v1424, %v1602
      %v1637 = vrot.slane %v220, 2
      %v1638 = vrot.slane %v221, 2
      %v1639 = vsel %vm848, %v1637, %v1638
      %v1640 = vrot.slane %v222, 2
      %v1641 = vsel %vm848, %v1638, %v1640
      %v1644 = vpack.c.bf16 %v1641, %v1639
      %s1645 = scalar_lea.vmem %s1, 10
      %v1646 = vld [vmem:[%s1645] sm:$0x3]
      %v1648 = vsel %vm422, %v1644, 0
      %v1651 = vsel %vm471, %v1646, 0
      %1653 = vmatprep.subr.bf16.mxu0 0
      %1654 = vmatpush1.bf16.msra.mxu0 %v1651
      %1655 = vmatprep.subr.bf16.mxu0 0
      %1656 = vmatpush1.bf16.msra.mxu0 0
      %1657 = vmatprep.subr.bf16.mxu0 0
      %1658 = vmatpush1.bf16.msra.mxu0 0
      %1659 = vmatprep.subr.bf16.mxu0 0
      %1660 = vmatpush1.bf16.msra.mxu0 0
      %1661 = vmatprep.subr.bf16.mxu0 0
      %1662 = vmatpush1.bf16.msra.mxu0 0
      %1663 = vmatprep.subr.bf16.mxu0 0
      %1664 = vmatpush1.bf16.msra.mxu0 0
      %1665 = vmatprep.subr.bf16.mxu0 0
      %1666 = vmatpush1.bf16.msra.mxu0 0
      %1667 = vmatprep.subr.bf16.mxu0 0
      %1668 = vmatpush1.bf16.msra.mxu0 0
      %1669 = vmatprep.subr.bf16.mxu0 0
      %1670 = vmatpush1.bf16.msra.mxu0 0
      %1671 = vmatprep.subr.bf16.mxu0 0
      %1672 = vmatpush1.bf16.msra.mxu0 0
      %1673 = vmatprep.subr.bf16.mxu0 0
      %1674 = vmatpush1.bf16.msra.mxu0 0
      %1675 = vmatprep.subr.bf16.mxu0 0
      %1676 = vmatpush1.bf16.msra.mxu0 0
      %1677 = vmatprep.subr.bf16.mxu0 0
      %1678 = vmatpush1.bf16.msra.mxu0 0
      %1679 = vmatprep.subr.bf16.mxu0 0
      %1680 = vmatpush1.bf16.msra.mxu0 0
      %1681 = vmatprep.subr.bf16.mxu0 0
      %1682 = vmatpush1.bf16.msra.mxu0 0
      %1683 = vmatprep.subr.bf16.mxu0 0
      %1684 = vmatpush1.bf16.msra.mxu0 0
      %1685 = vmatprep.mubr.bf16.mxu0 0
      %1686 = vmatmul.mubr.bf16.gmra.mrb[0].mxu0 %v983
      %v1687 = vpop.f32.mrb[0].mxu0
      %v1688 = vadd.f32 0.0, %v1687
      %v1689 = vpop.f32.mrb[0].mxu0
      %v1690 = vpop.f32.mrb[0].mxu0
      %v1691 = vadd.f32 0.0, %v1690
      %v1692 = vpop.f32.mrb[0].mxu0
      %1693 = vmatprep.mubr.bf16.mxu0 0
      %1694 = vmatmul.mubr.bf16.gmra.mrb[0].mxu0 %v986
      %v1695 = vpop.f32.mrb[0].mxu0
      %v1696 = vadd.f32 0.0, %v1695
      %v1697 = vpop.f32.mrb[0].mxu0
      %v1698 = vpop.f32.mrb[0].mxu0
      %v1699 = vadd.f32 0.0, %v1698
      %v1700 = vpop.f32.mrb[0].mxu0
      %1701 = vmatprep.mubr.bf16.mxu0 0
      %1702 = vmatmul.mubr.bf16.gmra.mrb[0].mxu0 %v989
      %v1703 = vpop.f32.mrb[0].mxu0
      %v1704 = vadd.f32 0.0, %v1703
      %v1705 = vpop.f32.mrb[0].mxu0
      %v1706 = vpop.f32.mrb[0].mxu0
      %v1707 = vadd.f32 0.0, %v1706
      %v1708 = vpop.f32.mrb[0].mxu0
      %1709 = vmatprep.mubr.bf16.mxu0 0
      %1710 = vmatmul.mubr.bf16.gmra.mrb[0].mxu0 %v992
      %v1711 = vpop.f32.mrb[0].mxu0
      %v1712 = vadd.f32 0.0, %v1711
      %v1713 = vpop.f32.mrb[0].mxu0
      %v1714 = vpop.f32.mrb[0].mxu0
      %v1715 = vadd.f32 0.0, %v1714
      %v1716 = vpop.f32.mrb[0].mxu0
      %1717 = vmatprep.mubr.bf16.mxu0 0
      %1718 = vmatmul.mubr.bf16.gmra.mrb[0].mxu0 %v995
      %v1719 = vpop.f32.mrb[0].mxu0
      %v1720 = vadd.f32 0.0, %v1719
      %v1721 = vpop.f32.mrb[0].mxu0
      %v1722 = vpop.f32.mrb[0].mxu0
      %v1723 = vadd.f32 0.0, %v1722
      %v1724 = vpop.f32.mrb[0].mxu0
      %1725 = vmatprep.mubr.bf16.mxu0 0
      %1726 = vmatmul.mubr.bf16.gmra.mrb[0].mxu0 %v998
      %v1727 = vpop.f32.mrb[0].mxu0
      %v1728 = vadd.f32 0.0, %v1727
      %v1729 = vpop.f32.mrb[0].mxu0
      %v1730 = vpop.f32.mrb[0].mxu0
      %v1731 = vadd.f32 0.0, %v1730
      %v1732 = vpop.f32.mrb[0].mxu0
      %1733 = vmatprep.mubr.bf16.mxu0 0
      %1734 = vmatmul.mubr.bf16.gmra.mrb[0].mxu0 %v1001
      %v1735 = vpop.f32.mrb[0].mxu0
      %v1736 = vadd.f32 0.0, %v1735
      %v1737 = vpop.f32.mrb[0].mxu0
      %v1738 = vpop.f32.mrb[0].mxu0
      %v1739 = vadd.f32 0.0, %v1738
      %v1740 = vpop.f32.mrb[0].mxu0
      %1741 = vmatprep.mubr.bf16.mxu0 0
      %1742 = vmatmul.mubr.bf16.gmra.mrb[0].mxu0 %v1004
      %v1743 = vpop.f32.mrb[0].mxu0
      %v1744 = vadd.f32 0.0, %v1743
      %v1745 = vpop.f32.mrb[0].mxu0
      %v1746 = vpop.f32.mrb[0].mxu0
      %v1747 = vadd.f32 0.0, %v1746
      %v1748 = vpop.f32.mrb[0].mxu0
      %1749 = vmatprep.mubr.bf16.mxu0 0
      %1750 = vmatmul.mubr.bf16.gmra.mrb[0].mxu0 %v1007
      %v1751 = vpop.f32.mrb[0].mxu0
      %v1752 = vadd.f32 0.0, %v1751
      %v1753 = vpop.f32.mrb[0].mxu0
      %v1754 = vpop.f32.mrb[0].mxu0
      %v1755 = vadd.f32 0.0, %v1754
      %v1756 = vpop.f32.mrb[0].mxu0
      %1757 = vmatprep.mubr.bf16.mxu0 0
      %1758 = vmatmul.mubr.bf16.gmra.mrb[0].mxu0 %v1010
      %v1759 = vpop.f32.mrb[0].mxu0
      %v1760 = vadd.f32 0.0, %v1759
      %v1761 = vpop.f32.mrb[0].mxu0
      %v1762 = vpop.f32.mrb[0].mxu0
      %v1763 = vadd.f32 0.0, %v1762
      %v1764 = vpop.f32.mrb[0].mxu0
      %1765 = vmatprep.mubr.bf16.mxu0 0
      %1766 = vmatmul.mubr.bf16.gmra.mrb[0].mxu0 %v1013
      %v1767 = vpop.f32.mrb[0].mxu0
      %v1768 = vadd.f32 0.0, %v1767
      %v1769 = vpop.f32.mrb[0].mxu0
      %v1770 = vpop.f32.mrb[0].mxu0
      %v1771 = vadd.f32 0.0, %v1770
      %v1772 = vpop.f32.mrb[0].mxu0
      %1773 = vmatprep.mubr.bf16.mxu0 0
      %1774 = vmatmul.mubr.bf16.gmra.mrb[0].mxu0 %v1016
      %v1775 = vpop.f32.mrb[0].mxu0
      %v1776 = vadd.f32 0.0, %v1775
      %v1777 = vpop.f32.mrb[0].mxu0
      %v1778 = vpop.f32.mrb[0].mxu0
      %v1779 = vadd.f32 0.0, %v1778
      %v1780 = vpop.f32.mrb[0].mxu0
      %1781 = vmatprep.mubr.bf16.mxu0 0
      %1782 = vmatmul.mubr.bf16.gmra.mrb[0].mxu0 %v1019
      %v1783 = vpop.f32.mrb[0].mxu0
      %v1784 = vadd.f32 0.0, %v1783
      %v1785 = vpop.f32.mrb[0].mxu0
      %v1786 = vpop.f32.mrb[0].mxu0
      %v1787 = vadd.f32 0.0, %v1786
      %v1788 = vpop.f32.mrb[0].mxu0
      %1789 = vmatprep.mubr.bf16.mxu0 0
      %1790 = vmatmul.mubr.bf16.gmra.mrb[0].mxu0 %v1022
      %v1791 = vpop.f32.mrb[0].mxu0
      %v1792 = vadd.f32 0.0, %v1791
      %v1793 = vpop.f32.mrb[0].mxu0
      %v1794 = vpop.f32.mrb[0].mxu0
      %v1795 = vadd.f32 0.0, %v1794
      %v1796 = vpop.f32.mrb[0].mxu0
      %1797 = vmatprep.mubr.bf16.mxu0 0
      %1798 = vmatmul.mubr.bf16.gmra.mrb[0].mxu0 %v1025
      %v1799 = vpop.f32.mrb[0].mxu0
      %v1800 = vadd.f32 0.0, %v1799
      %v1801 = vpop.f32.mrb[0].mxu0
      %v1802 = vpop.f32.mrb[0].mxu0
      %v1803 = vadd.f32 0.0, %v1802
      %v1804 = vpop.f32.mrb[0].mxu0
      %1805 = vmatprep.mubr.bf16.mxu0 0
      %1806 = vmatmul.mubr.bf16.gmra.mrb[0].mxu0 %v1648
      %v1807 = vpop.f32.mrb[0].mxu0
      %v1808 = vadd.f32 0.0, %v1807
      %v1809 = vpop.f32.mrb[0].mxu0
      %v1810 = vpop.f32.mrb[0].mxu0
      %v1811 = vadd.f32 0.0, %v1810
      %v1812 = vpop.f32.mrb[0].mxu0
      %1813 = vdwg.mxu0
      %v1814 = vadd.f32 %v1605, %v1688
      %v1815 = vadd.f32 %v1606, %v1691
      %v1816 = vadd.f32 %v1607, %v1696
      %v1817 = vadd.f32 %v1608, %v1699
      %v1818 = vadd.f32 %v1609, %v1704
      %v1819 = vadd.f32 %v1610, %v1707
      %v1820 = vadd.f32 %v1611, %v1712
      %v1821 = vadd.f32 %v1612, %v1715
      %v1822 = vadd.f32 %v1613, %v1720
      %v1823 = vadd.f32 %v1614, %v1723
      %v1824 = vadd.f32 %v1615, %v1728
      %v1825 = vadd.f32 %v1616, %v1731
      %v1826 = vadd.f32 %v1617, %v1736
      %v1827 = vadd.f32 %v1618, %v1739
      %v1828 = vadd.f32 %v1619, %v1744
      %v1829 = vadd.f32 %v1620, %v1747
      %v1830 = vadd.f32 %v1621, %v1752
      %v1831 = vadd.f32 %v1622, %v1755
      %v1832 = vadd.f32 %v1623, %v1760
      %v1833 = vadd.f32 %v1624, %v1763
      %v1834 = vadd.f32 %v1625, %v1768
      %v1835 = vadd.f32 %v1626, %v1771
      %v1836 = vadd.f32 %v1627, %v1776
      %v1837 = vadd.f32 %v1628, %v1779
      %v1838 = vadd.f32 %v1629, %v1784
      %v1839 = vadd.f32 %v1630, %v1787
      %v1840 = vadd.f32 %v1631, %v1792
      %v1841 = vadd.f32 %v1632, %v1795
      %v1842 = vadd.f32 %v1633, %v1800
      %v1843 = vadd.f32 %v1634, %v1803
      %v1844 = vadd.f32 %v1635, %v1808
      %v1845 = vadd.f32 %v1636, %v1811
      %v1846 = vpack.c.bf16 %v224, %v223
      %s1847 = scalar_lea.vmem %s1, 12
      %v1848 = vld [vmem:[%s1847] sm:$0x3]
      %v1850 = vsel %vm422, %v1846, 0
      %v1853 = vsel %vm471, %v1848, 0
      %1855 = vmatprep.subr.bf16.mxu0 0
      %1856 = vmatpush1.bf16.msra.mxu0 %v1853
      %1857 = vmatprep.subr.bf16.mxu0 0
      %1858 = vmatpush1.bf16.msra.mxu0 0
      %1859 = vmatprep.subr.bf16.mxu0 0
      %1860 = vmatpush1.bf16.msra.mxu0 0
      %1861 = vmatprep.subr.bf16.mxu0 0
      %1862 = vmatpush1.bf16.msra.mxu0 0
      %1863 = vmatprep.subr.bf16.mxu0 0
      %1864 = vmatpush1.bf16.msra.mxu0 0
      %1865 = vmatprep.subr.bf16.mxu0 0
      %1866 = vmatpush1.bf16.msra.mxu0 0
      %1867 = vmatprep.subr.bf16.mxu0 0
      %1868 = vmatpush1.bf16.msra.mxu0 0
      %1869 = vmatprep.subr.bf16.mxu0 0
      %1870 = vmatpush1.bf16.msra.mxu0 0
      %1871 = vmatprep.subr.bf16.mxu0 0
      %1872 = vmatpush1.bf16.msra.mxu0 0
      %1873 = vmatprep.subr.bf16.mxu0 0
      %1874 = vmatpush1.bf16.msra.mxu0 0
      %1875 = vmatprep.subr.bf16.mxu0 0
      %1876 = vmatpush1.bf16.msra.mxu0 0
      %1877 = vmatprep.subr.bf16.mxu0 0
      %1878 = vmatpush1.bf16.msra.mxu0 0
      %1879 = vmatprep.subr.bf16.mxu0 0
      %1880 = vmatpush1.bf16.msra.mxu0 0
      %1881 = vmatprep.subr.bf16.mxu0 0
      %1882 = vmatpush1.bf16.msra.mxu0 0
      %1883 = vmatprep.subr.bf16.mxu0 0
      %1884 = vmatpush1.bf16.msra.mxu0 0
      %1885 = vmatprep.subr.bf16.mxu0 0
      %1886 = vmatpush1.bf16.msra.mxu0 0
      %1887 = vmatprep.mubr.bf16.mxu0 0
      %1888 = vmatmul.mubr.bf16.gmra.mrb[0].mxu0 %v643
      %v1889 = vpop.f32.mrb[0].mxu0
      %v1890 = vadd.f32 0.0, %v1889
      %v1891 = vpop.f32.mrb[0].mxu0
      %v1892 = vpop.f32.mrb[0].mxu0
      %v1893 = vadd.f32 0.0, %v1892
      %v1894 = vpop.f32.mrb[0].mxu0
      %1895 = vmatprep.mubr.bf16.mxu0 0
      %1896 = vmatmul.mubr.bf16.gmra.mrb[0].mxu0 %v646
      %v1897 = vpop.f32.mrb[0].mxu0
      %v1898 = vadd.f32 0.0, %v1897
      %v1899 = vpop.f32.mrb[0].mxu0
      %v1900 = vpop.f32.mrb[0].mxu0
      %v1901 = vadd.f32 0.0, %v1900
      %v1902 = vpop.f32.mrb[0].mxu0
      %1903 = vmatprep.mubr.bf16.mxu0 0
      %1904 = vmatmul.mubr.bf16.gmra.mrb[0].mxu0 %v649
      %v1905 = vpop.f32.mrb[0].mxu0
      %v1906 = vadd.f32 0.0, %v1905
      %v1907 = vpop.f32.mrb[0].mxu0
      %v1908 = vpop.f32.mrb[0].mxu0
      %v1909 = vadd.f32 0.0, %v1908
      %v1910 = vpop.f32.mrb[0].mxu0
      %1911 = vmatprep.mubr.bf16.mxu0 0
      %1912 = vmatmul.mubr.bf16.gmra.mrb[0].mxu0 %v652
      %v1913 = vpop.f32.mrb[0].mxu0
      %v1914 = vadd.f32 0.0, %v1913
      %v1915 = vpop.f32.mrb[0].mxu0
      %v1916 = vpop.f32.mrb[0].mxu0
      %v1917 = vadd.f32 0.0, %v1916
      %v1918 = vpop.f32.mrb[0].mxu0
      %1919 = vmatprep.mubr.bf16.mxu0 0
      %1920 = vmatmul.mubr.bf16.gmra.mrb[0].mxu0 %v655
      %v1921 = vpop.f32.mrb[0].mxu0
      %v1922 = vadd.f32 0.0, %v1921
      %v1923 = vpop.f32.mrb[0].mxu0
      %v1924 = vpop.f32.mrb[0].mxu0
      %v1925 = vadd.f32 0.0, %v1924
      %v1926 = vpop.f32.mrb[0].mxu0
      %1927 = vmatprep.mubr.bf16.mxu0 0
      %1928 = vmatmul.mubr.bf16.gmra.mrb[0].mxu0 %v658
      %v1929 = vpop.f32.mrb[0].mxu0
      %v1930 = vadd.f32 0.0, %v1929
      %v1931 = vpop.f32.mrb[0].mxu0
      %v1932 = vpop.f32.mrb[0].mxu0
      %v1933 = vadd.f32 0.0, %v1932
      %v1934 = vpop.f32.mrb[0].mxu0
      %1935 = vmatprep.mubr.bf16.mxu0 0
      %1936 = vmatmul.mubr.bf16.gmra.mrb[0].mxu0 %v661
      %v1937 = vpop.f32.mrb[0].mxu0
      %v1938 = vadd.f32 0.0, %v1937
      %v1939 = vpop.f32.mrb[0].mxu0
      %v1940 = vpop.f32.mrb[0].mxu0
      %v1941 = vadd.f32 0.0, %v1940
      %v1942 = vpop.f32.mrb[0].mxu0
      %1943 = vmatprep.mubr.bf16.mxu0 0
      %1944 = vmatmul.mubr.bf16.gmra.mrb[0].mxu0 %v664
      %v1945 = vpop.f32.mrb[0].mxu0
      %v1946 = vadd.f32 0.0, %v1945
      %v1947 = vpop.f32.mrb[0].mxu0
      %v1948 = vpop.f32.mrb[0].mxu0
      %v1949 = vadd.f32 0.0, %v1948
      %v1950 = vpop.f32.mrb[0].mxu0
      %1951 = vmatprep.mubr.bf16.mxu0 0
      %1952 = vmatmul.mubr.bf16.gmra.mrb[0].mxu0 %v667
      %v1953 = vpop.f32.mrb[0].mxu0
      %v1954 = vadd.f32 0.0, %v1953
      %v1955 = vpop.f32.mrb[0].mxu0
      %v1956 = vpop.f32.mrb[0].mxu0
      %v1957 = vadd.f32 0.0, %v1956
      %v1958 = vpop.f32.mrb[0].mxu0
      %1959 = vmatprep.mubr.bf16.mxu0 0
      %1960 = vmatmul.mubr.bf16.gmra.mrb[0].mxu0 %v670
      %v1961 = vpop.f32.mrb[0].mxu0
      %v1962 = vadd.f32 0.0, %v1961
      %v1963 = vpop.f32.mrb[0].mxu0
      %v1964 = vpop.f32.mrb[0].mxu0
      %v1965 = vadd.f32 0.0, %v1964
      %v1966 = vpop.f32.mrb[0].mxu0
      %1967 = vmatprep.mubr.bf16.mxu0 0
      %1968 = vmatmul.mubr.bf16.gmra.mrb[0].mxu0 %v673
      %v1969 = vpop.f32.mrb[0].mxu0
      %v1970 = vadd.f32 0.0, %v1969
      %v1971 = vpop.f32.mrb[0].mxu0
      %v1972 = vpop.f32.mrb[0].mxu0
      %v1973 = vadd.f32 0.0, %v1972
      %v1974 = vpop.f32.mrb[0].mxu0
      %1975 = vmatprep.mubr.bf16.mxu0 0
      %1976 = vmatmul.mubr.bf16.gmra.mrb[0].mxu0 %v676
      %v1977 = vpop.f32.mrb[0].mxu0
      %v1978 = vadd.f32 0.0, %v1977
      %v1979 = vpop.f32.mrb[0].mxu0
      %v1980 = vpop.f32.mrb[0].mxu0
      %v1981 = vadd.f32 0.0, %v1980
      %v1982 = vpop.f32.mrb[0].mxu0
      %1983 = vmatprep.mubr.bf16.mxu0 0
      %1984 = vmatmul.mubr.bf16.gmra.mrb[0].mxu0 %v679
      %v1985 = vpop.f32.mrb[0].mxu0
      %v1986 = vadd.f32 0.0, %v1985
      %v1987 = vpop.f32.mrb[0].mxu0
      %v1988 = vpop.f32.mrb[0].mxu0
      %v1989 = vadd.f32 0.0, %v1988
      %v1990 = vpop.f32.mrb[0].mxu0
      %1991 = vmatprep.mubr.bf16.mxu0 0
      %1992 = vmatmul.mubr.bf16.gmra.mrb[0].mxu0 %v682
      %v1993 = vpop.f32.mrb[0].mxu0
      %v1994 = vadd.f32 0.0, %v1993
      %v1995 = vpop.f32.mrb[0].mxu0
      %v1996 = vpop.f32.mrb[0].mxu0
      %v1997 = vadd.f32 0.0, %v1996
      %v1998 = vpop.f32.mrb[0].mxu0
      %1999 = vmatprep.mubr.bf16.mxu0 0
      %2000 = vmatmul.mubr.bf16.gmra.mrb[0].mxu0 %v1227
      %v2001 = vpop.f32.mrb[0].mxu0
      %v2002 = vadd.f32 0.0, %v2001
      %v2003 = vpop.f32.mrb[0].mxu0
      %v2004 = vpop.f32.mrb[0].mxu0
      %v2005 = vadd.f32 0.0, %v2004
      %v2006 = vpop.f32.mrb[0].mxu0
      %2007 = vmatprep.mubr.bf16.mxu0 0
      %2008 = vmatmul.mubr.bf16.gmra.mrb[0].mxu0 %v1850
      %v2009 = vpop.f32.mrb[0].mxu0
      %v2010 = vadd.f32 0.0, %v2009
      %v2011 = vpop.f32.mrb[0].mxu0
      %v2012 = vpop.f32.mrb[0].mxu0
      %v2013 = vadd.f32 0.0, %v2012
      %v2014 = vpop.f32.mrb[0].mxu0
      %2015 = vdwg.mxu0
      %v2016 = vadd.f32 %v1814, %v1890
      %v2017 = vadd.f32 %v1815, %v1893
      %v2018 = vadd.f32 %v1816, %v1898
      %v2019 = vadd.f32 %v1817, %v1901
      %v2020 = vadd.f32 %v1818, %v1906
      %v2021 = vadd.f32 %v1819, %v1909
      %v2022 = vadd.f32 %v1820, %v1914
      %v2023 = vadd.f32 %v1821, %v1917
      %v2024 = vadd.f32 %v1822, %v1922
      %v2025 = vadd.f32 %v1823, %v1925
      %v2026 = vadd.f32 %v1824, %v1930
      %v2027 = vadd.f32 %v1825, %v1933
      %v2028 = vadd.f32 %v1826, %v1938
      %v2029 = vadd.f32 %v1827, %v1941
      %v2030 = vadd.f32 %v1828, %v1946
      %v2031 = vadd.f32 %v1829, %v1949
      %v2032 = vadd.f32 %v1830, %v1954
      %v2033 = vadd.f32 %v1831, %v1957
      %v2034 = vadd.f32 %v1832, %v1962
      %v2035 = vadd.f32 %v1833, %v1965
      %v2036 = vadd.f32 %v1834, %v1970
      %v2037 = vadd.f32 %v1835, %v1973
      %v2038 = vadd.f32 %v1836, %v1978
      %v2039 = vadd.f32 %v1837, %v1981
      %v2040 = vadd.f32 %v1838, %v1986
      %v2041 = vadd.f32 %v1839, %v1989
      %v2042 = vadd.f32 %v1840, %v1994
      %v2043 = vadd.f32 %v1841, %v1997
      %v2044 = vadd.f32 %v1842, %v2002
      %v2045 = vadd.f32 %v1843, %v2005
      %v2046 = vadd.f32 %v1844, %v2010
      %v2047 = vadd.f32 %v1845, %v2013
      %v2051 = vrot.slane %v223, 1
      %v2052 = vrot.slane %v224, 1
      %v2053 = vsel %vm291, %v2051, %v2052
      %v2054 = vrot.slane %v225, 1
      %v2055 = vsel %vm291, %v2052, %v2054
      %v2058 = vpack.c.bf16 %v2055, %v2053
      %s2059 = scalar_lea.vmem %s1, 14
      %v2060 = vld [vmem:[%s2059] sm:$0x3]
      %v2062 = vsel %vm422, %v2058, 0
      %v2065 = vsel %vm471, %v2060, 0
      %2067 = vmatprep.subr.bf16.mxu0 0
      %2068 = vmatpush1.bf16.msra.mxu0 %v2065
      %2069 = vmatprep.subr.bf16.mxu0 0
      %2070 = vmatpush1.bf16.msra.mxu0 0
      %2071 = vmatprep.subr.bf16.mxu0 0
      %2072 = vmatpush1.bf16.msra.mxu0 0
      %2073 = vmatprep.subr.bf16.mxu0 0
      %2074 = vmatpush1.bf16.msra.mxu0 0
      %2075 = vmatprep.subr.bf16.mxu0 0
      %2076 = vmatpush1.bf16.msra.mxu0 0
      %2077 = vmatprep.subr.bf16.mxu0 0
      %2078 = vmatpush1.bf16.msra.mxu0 0
      %2079 = vmatprep.subr.bf16.mxu0 0
      %2080 = vmatpush1.bf16.msra.mxu0 0
      %2081 = vmatprep.subr.bf16.mxu0 0
      %2082 = vmatpush1.bf16.msra.mxu0 0
      %2083 = vmatprep.subr.bf16.mxu0 0
      %2084 = vmatpush1.bf16.msra.mxu0 0
      %2085 = vmatprep.subr.bf16.mxu0 0
      %2086 = vmatpush1.bf16.msra.mxu0 0
      %2087 = vmatprep.subr.bf16.mxu0 0
      %2088 = vmatpush1.bf16.msra.mxu0 0
      %2089 = vmatprep.subr.bf16.mxu0 0
      %2090 = vmatpush1.bf16.msra.mxu0 0
      %2091 = vmatprep.subr.bf16.mxu0 0
      %2092 = vmatpush1.bf16.msra.mxu0 0
      %2093 = vmatprep.subr.bf16.mxu0 0
      %2094 = vmatpush1.bf16.msra.mxu0 0
      %2095 = vmatprep.subr.bf16.mxu0 0
      %2096 = vmatpush1.bf16.msra.mxu0 0
      %2097 = vmatprep.subr.bf16.mxu0 0
      %2098 = vmatpush1.bf16.msra.mxu0 0
      %2099 = vmatprep.mubr.bf16.mxu0 0
      %2100 = vmatmul.mubr.bf16.gmra.mrb[0].mxu0 %v430
      %v2101 = vpop.f32.mrb[0].mxu0
      %v2102 = vadd.f32 0.0, %v2101
      %v2103 = vpop.f32.mrb[0].mxu0
      %v2104 = vpop.f32.mrb[0].mxu0
      %v2105 = vadd.f32 0.0, %v2104
      %v2106 = vpop.f32.mrb[0].mxu0
      %2107 = vmatprep.mubr.bf16.mxu0 0
      %2108 = vmatmul.mubr.bf16.gmra.mrb[0].mxu0 %v433
      %v2109 = vpop.f32.mrb[0].mxu0
      %v2110 = vadd.f32 0.0, %v2109
      %v2111 = vpop.f32.mrb[0].mxu0
      %v2112 = vpop.f32.mrb[0].mxu0
      %v2113 = vadd.f32 0.0, %v2112
      %v2114 = vpop.f32.mrb[0].mxu0
      %2115 = vmatprep.mubr.bf16.mxu0 0
      %2116 = vmatmul.mubr.bf16.gmra.mrb[0].mxu0 %v436
      %v2117 = vpop.f32.mrb[0].mxu0
      %v2118 = vadd.f32 0.0, %v2117
      %v2119 = vpop.f32.mrb[0].mxu0
      %v2120 = vpop.f32.mrb[0].mxu0
      %v2121 = vadd.f32 0.0, %v2120
      %v2122 = vpop.f32.mrb[0].mxu0
      %2123 = vmatprep.mubr.bf16.mxu0 0
      %2124 = vmatmul.mubr.bf16.gmra.mrb[0].mxu0 %v439
      %v2125 = vpop.f32.mrb[0].mxu0
      %v2126 = vadd.f32 0.0, %v2125
      %v2127 = vpop.f32.mrb[0].mxu0
      %v2128 = vpop.f32.mrb[0].mxu0
      %v2129 = vadd.f32 0.0, %v2128
      %v2130 = vpop.f32.mrb[0].mxu0
      %2131 = vmatprep.mubr.bf16.mxu0 0
      %2132 = vmatmul.mubr.bf16.gmra.mrb[0].mxu0 %v442
      %v2133 = vpop.f32.mrb[0].mxu0
      %v2134 = vadd.f32 0.0, %v2133
      %v2135 = vpop.f32.mrb[0].mxu0
      %v2136 = vpop.f32.mrb[0].mxu0
      %v2137 = vadd.f32 0.0, %v2136
      %v2138 = vpop.f32.mrb[0].mxu0
      %2139 = vmatprep.mubr.bf16.mxu0 0
      %2140 = vmatmul.mubr.bf16.gmra.mrb[0].mxu0 %v445
      %v2141 = vpop.f32.mrb[0].mxu0
      %v2142 = vadd.f32 0.0, %v2141
      %v2143 = vpop.f32.mrb[0].mxu0
      %v2144 = vpop.f32.mrb[0].mxu0
      %v2145 = vadd.f32 0.0, %v2144
      %v2146 = vpop.f32.mrb[0].mxu0
      %2147 = vmatprep.mubr.bf16.mxu0 0
      %2148 = vmatmul.mubr.bf16.gmra.mrb[0].mxu0 %v448
      %v2149 = vpop.f32.mrb[0].mxu0
      %v2150 = vadd.f32 0.0, %v2149
      %v2151 = vpop.f32.mrb[0].mxu0
      %v2152 = vpop.f32.mrb[0].mxu0
      %v2153 = vadd.f32 0.0, %v2152
      %v2154 = vpop.f32.mrb[0].mxu0
      %2155 = vmatprep.mubr.bf16.mxu0 0
      %2156 = vmatmul.mubr.bf16.gmra.mrb[0].mxu0 %v451
      %v2157 = vpop.f32.mrb[0].mxu0
      %v2158 = vadd.f32 0.0, %v2157
      %v2159 = vpop.f32.mrb[0].mxu0
      %v2160 = vpop.f32.mrb[0].mxu0
      %v2161 = vadd.f32 0.0, %v2160
      %v2162 = vpop.f32.mrb[0].mxu0
      %2163 = vmatprep.mubr.bf16.mxu0 0
      %2164 = vmatmul.mubr.bf16.gmra.mrb[0].mxu0 %v454
      %v2165 = vpop.f32.mrb[0].mxu0
      %v2166 = vadd.f32 0.0, %v2165
      %v2167 = vpop.f32.mrb[0].mxu0
      %v2168 = vpop.f32.mrb[0].mxu0
      %v2169 = vadd.f32 0.0, %v2168
      %v2170 = vpop.f32.mrb[0].mxu0
      %2171 = vmatprep.mubr.bf16.mxu0 0
      %2172 = vmatmul.mubr.bf16.gmra.mrb[0].mxu0 %v457
      %v2173 = vpop.f32.mrb[0].mxu0
      %v2174 = vadd.f32 0.0, %v2173
      %v2175 = vpop.f32.mrb[0].mxu0
      %v2176 = vpop.f32.mrb[0].mxu0
      %v2177 = vadd.f32 0.0, %v2176
      %v2178 = vpop.f32.mrb[0].mxu0
      %2179 = vmatprep.mubr.bf16.mxu0 0
      %2180 = vmatmul.mubr.bf16.gmra.mrb[0].mxu0 %v460
      %v2181 = vpop.f32.mrb[0].mxu0
      %v2182 = vadd.f32 0.0, %v2181
      %v2183 = vpop.f32.mrb[0].mxu0
      %v2184 = vpop.f32.mrb[0].mxu0
      %v2185 = vadd.f32 0.0, %v2184
      %v2186 = vpop.f32.mrb[0].mxu0
      %2187 = vmatprep.mubr.bf16.mxu0 0
      %2188 = vmatmul.mubr.bf16.gmra.mrb[0].mxu0 %v463
      %v2189 = vpop.f32.mrb[0].mxu0
      %v2190 = vadd.f32 0.0, %v2189
      %v2191 = vpop.f32.mrb[0].mxu0
      %v2192 = vpop.f32.mrb[0].mxu0
      %v2193 = vadd.f32 0.0, %v2192
      %v2194 = vpop.f32.mrb[0].mxu0
      %2195 = vmatprep.mubr.bf16.mxu0 0
      %2196 = vmatmul.mubr.bf16.gmra.mrb[0].mxu0 %v466
      %v2197 = vpop.f32.mrb[0].mxu0
      %v2198 = vadd.f32 0.0, %v2197
      %v2199 = vpop.f32.mrb[0].mxu0
      %v2200 = vpop.f32.mrb[0].mxu0
      %v2201 = vadd.f32 0.0, %v2200
      %v2202 = vpop.f32.mrb[0].mxu0
      %2203 = vmatprep.mubr.bf16.mxu0 0
      %2204 = vmatmul.mubr.bf16.gmra.mrb[0].mxu0 %v469
      %v2205 = vpop.f32.mrb[0].mxu0
      %v2206 = vadd.f32 0.0, %v2205
      %v2207 = vpop.f32.mrb[0].mxu0
      %v2208 = vpop.f32.mrb[0].mxu0
      %v2209 = vadd.f32 0.0, %v2208
      %v2210 = vpop.f32.mrb[0].mxu0
      %2211 = vmatprep.mubr.bf16.mxu0 0
      %2212 = vmatmul.mubr.bf16.gmra.mrb[0].mxu0 %v1439
      %v2213 = vpop.f32.mrb[0].mxu0
      %v2214 = vadd.f32 0.0, %v2213
      %v2215 = vpop.f32.mrb[0].mxu0
      %v2216 = vpop.f32.mrb[0].mxu0
      %v2217 = vadd.f32 0.0, %v2216
      %v2218 = vpop.f32.mrb[0].mxu0
      %2219 = vmatprep.mubr.bf16.mxu0 0
      %2220 = vmatmul.mubr.bf16.gmra.mrb[0].mxu0 %v2062
      %v2221 = vpop.f32.mrb[0].mxu0
      %v2222 = vadd.f32 0.0, %v2221
      %v2223 = vpop.f32.mrb[0].mxu0
      %v2224 = vpop.f32.mrb[0].mxu0
      %v2225 = vadd.f32 0.0, %v2224
      %v2226 = vpop.f32.mrb[0].mxu0
      %2227 = vdwg.mxu0
      %v2228 = vadd.f32 %v2016, %v2102
      %v2229 = vadd.f32 %v2017, %v2105
      %v2230 = vadd.f32 %v2018, %v2110
      %v2231 = vadd.f32 %v2019, %v2113
      %v2232 = vadd.f32 %v2020, %v2118
      %v2233 = vadd.f32 %v2021, %v2121
      %v2234 = vadd.f32 %v2022, %v2126
      %v2235 = vadd.f32 %v2023, %v2129
      %v2236 = vadd.f32 %v2024, %v2134
      %v2237 = vadd.f32 %v2025, %v2137
      %v2238 = vadd.f32 %v2026, %v2142
      %v2239 = vadd.f32 %v2027, %v2145
      %v2240 = vadd.f32 %v2028, %v2150
      %v2241 = vadd.f32 %v2029, %v2153
      %v2242 = vadd.f32 %v2030, %v2158
      %v2243 = vadd.f32 %v2031, %v2161
      %v2244 = vadd.f32 %v2032, %v2166
      %v2245 = vadd.f32 %v2033, %v2169
      %v2246 = vadd.f32 %v2034, %v2174
      %v2247 = vadd.f32 %v2035, %v2177
      %v2248 = vadd.f32 %v2036, %v2182
      %v2249 = vadd.f32 %v2037, %v2185
      %v2250 = vadd.f32 %v2038, %v2190
      %v2251 = vadd.f32 %v2039, %v2193
      %v2252 = vadd.f32 %v2040, %v2198
      %v2253 = vadd.f32 %v2041, %v2201
      %v2254 = vadd.f32 %v2042, %v2206
      %v2255 = vadd.f32 %v2043, %v2209
      %v2256 = vadd.f32 %v2044, %v2214
      %v2257 = vadd.f32 %v2045, %v2217
      %v2258 = vadd.f32 %v2046, %v2222
      %v2259 = vadd.f32 %v2047, %v2225
      %v2260 = vrot.slane %v223, 2
      %v2261 = vrot.slane %v224, 2
      %v2262 = vsel %vm848, %v2260, %v2261
      %v2263 = vrot.slane %v225, 2
      %v2264 = vsel %vm848, %v2261, %v2263
      %v2267 = vpack.c.bf16 %v2264, %v2262
      %s2268 = scalar_lea.vmem %s1, 16
      %v2269 = vld [vmem:[%s2268] sm:$0x3]
      %v2271 = vsel %vm422, %v2267, 0
      %v2274 = vsel %vm471, %v2269, 0
      %2276 = vmatprep.subr.bf16.mxu0 0
      %2277 = vmatpush1.bf16.msra.mxu0 %v2274
      %2278 = vmatprep.subr.bf16.mxu0 0
      %2279 = vmatpush1.bf16.msra.mxu0 0
      %2280 = vmatprep.subr.bf16.mxu0 0
      %2281 = vmatpush1.bf16.msra.mxu0 0
      %2282 = vmatprep.subr.bf16.mxu0 0
      %2283 = vmatpush1.bf16.msra.mxu0 0
      %2284 = vmatprep.subr.bf16.mxu0 0
      %2285 = vmatpush1.bf16.msra.mxu0 0
      %2286 = vmatprep.subr.bf16.mxu0 0
      %2287 = vmatpush1.bf16.msra.mxu0 0
      %2288 = vmatprep.subr.bf16.mxu0 0
      %2289 = vmatpush1.bf16.msra.mxu0 0
      %2290 = vmatprep.subr.bf16.mxu0 0
      %2291 = vmatpush1.bf16.msra.mxu0 0
      %2292 = vmatprep.subr.bf16.mxu0 0
      %2293 = vmatpush1.bf16.msra.mxu0 0
      %2294 = vmatprep.subr.bf16.mxu0 0
      %2295 = vmatpush1.bf16.msra.mxu0 0
      %2296 = vmatprep.subr.bf16.mxu0 0
      %2297 = vmatpush1.bf16.msra.mxu0 0
      %2298 = vmatprep.subr.bf16.mxu0 0
      %2299 = vmatpush1.bf16.msra.mxu0 0
      %2300 = vmatprep.subr.bf16.mxu0 0
      %2301 = vmatpush1.bf16.msra.mxu0 0
      %2302 = vmatprep.subr.bf16.mxu0 0
      %2303 = vmatpush1.bf16.msra.mxu0 0
      %2304 = vmatprep.subr.bf16.mxu0 0
      %2305 = vmatpush1.bf16.msra.mxu0 0
      %2306 = vmatprep.subr.bf16.mxu0 0
      %2307 = vmatpush1.bf16.msra.mxu0 0
      %2308 = vmatprep.mubr.bf16.mxu0 0
      %2309 = vmatmul.mubr.bf16.gmra.mrb[0].mxu0 %v986
      %v2310 = vpop.f32.mrb[0].mxu0
      %v2311 = vadd.f32 0.0, %v2310
      %v2312 = vpop.f32.mrb[0].mxu0
      %v2313 = vpop.f32.mrb[0].mxu0
      %v2314 = vadd.f32 0.0, %v2313
      %v2315 = vpop.f32.mrb[0].mxu0
      %2316 = vmatprep.mubr.bf16.mxu0 0
      %2317 = vmatmul.mubr.bf16.gmra.mrb[0].mxu0 %v989
      %v2318 = vpop.f32.mrb[0].mxu0
      %v2319 = vadd.f32 0.0, %v2318
      %v2320 = vpop.f32.mrb[0].mxu0
      %v2321 = vpop.f32.mrb[0].mxu0
      %v2322 = vadd.f32 0.0, %v2321
      %v2323 = vpop.f32.mrb[0].mxu0
      %2324 = vmatprep.mubr.bf16.mxu0 0
      %2325 = vmatmul.mubr.bf16.gmra.mrb[0].mxu0 %v992
      %v2326 = vpop.f32.mrb[0].mxu0
      %v2327 = vadd.f32 0.0, %v2326
      %v2328 = vpop.f32.mrb[0].mxu0
      %v2329 = vpop.f32.mrb[0].mxu0
      %v2330 = vadd.f32 0.0, %v2329
      %v2331 = vpop.f32.mrb[0].mxu0
      %2332 = vmatprep.mubr.bf16.mxu0 0
      %2333 = vmatmul.mubr.bf16.gmra.mrb[0].mxu0 %v995
      %v2334 = vpop.f32.mrb[0].mxu0
      %v2335 = vadd.f32 0.0, %v2334
      %v2336 = vpop.f32.mrb[0].mxu0
      %v2337 = vpop.f32.mrb[0].mxu0
      %v2338 = vadd.f32 0.0, %v2337
      %v2339 = vpop.f32.mrb[0].mxu0
      %2340 = vmatprep.mubr.bf16.mxu0 0
      %2341 = vmatmul.mubr.bf16.gmra.mrb[0].mxu0 %v998
      %v2342 = vpop.f32.mrb[0].mxu0
      %v2343 = vadd.f32 0.0, %v2342
      %v2344 = vpop.f32.mrb[0].mxu0
      %v2345 = vpop.f32.mrb[0].mxu0
      %v2346 = vadd.f32 0.0, %v2345
      %v2347 = vpop.f32.mrb[0].mxu0
      %2348 = vmatprep.mubr.bf16.mxu0 0
      %2349 = vmatmul.mubr.bf16.gmra.mrb[0].mxu0 %v1001
      %v2350 = vpop.f32.mrb[0].mxu0
      %v2351 = vadd.f32 0.0, %v2350
      %v2352 = vpop.f32.mrb[0].mxu0
      %v2353 = vpop.f32.mrb[0].mxu0
      %v2354 = vadd.f32 0.0, %v2353
      %v2355 = vpop.f32.mrb[0].mxu0
      %2356 = vmatprep.mubr.bf16.mxu0 0
      %2357 = vmatmul.mubr.bf16.gmra.mrb[0].mxu0 %v1004
      %v2358 = vpop.f32.mrb[0].mxu0
      %v2359 = vadd.f32 0.0, %v2358
      %v2360 = vpop.f32.mrb[0].mxu0
      %v2361 = vpop.f32.mrb[0].mxu0
      %v2362 = vadd.f32 0.0, %v2361
      %v2363 = vpop.f32.mrb[0].mxu0
      %2364 = vmatprep.mubr.bf16.mxu0 0
      %2365 = vmatmul.mubr.bf16.gmra.mrb[0].mxu0 %v1007
      %v2366 = vpop.f32.mrb[0].mxu0
      %v2367 = vadd.f32 0.0, %v2366
      %v2368 = vpop.f32.mrb[0].mxu0
      %v2369 = vpop.f32.mrb[0].mxu0
      %v2370 = vadd.f32 0.0, %v2369
      %v2371 = vpop.f32.mrb[0].mxu0
      %2372 = vmatprep.mubr.bf16.mxu0 0
      %2373 = vmatmul.mubr.bf16.gmra.mrb[0].mxu0 %v1010
      %v2374 = vpop.f32.mrb[0].mxu0
      %v2375 = vadd.f32 0.0, %v2374
      %v2376 = vpop.f32.mrb[0].mxu0
      %v2377 = vpop.f32.mrb[0].mxu0
      %v2378 = vadd.f32 0.0, %v2377
      %v2379 = vpop.f32.mrb[0].mxu0
      %2380 = vmatprep.mubr.bf16.mxu0 0
      %2381 = vmatmul.mubr.bf16.gmra.mrb[0].mxu0 %v1013
      %v2382 = vpop.f32.mrb[0].mxu0
      %v2383 = vadd.f32 0.0, %v2382
      %v2384 = vpop.f32.mrb[0].mxu0
      %v2385 = vpop.f32.mrb[0].mxu0
      %v2386 = vadd.f32 0.0, %v2385
      %v2387 = vpop.f32.mrb[0].mxu0
      %2388 = vmatprep.mubr.bf16.mxu0 0
      %2389 = vmatmul.mubr.bf16.gmra.mrb[0].mxu0 %v1016
      %v2390 = vpop.f32.mrb[0].mxu0
      %v2391 = vadd.f32 0.0, %v2390
      %v2392 = vpop.f32.mrb[0].mxu0
      %v2393 = vpop.f32.mrb[0].mxu0
      %v2394 = vadd.f32 0.0, %v2393
      %v2395 = vpop.f32.mrb[0].mxu0
      %2396 = vmatprep.mubr.bf16.mxu0 0
      %2397 = vmatmul.mubr.bf16.gmra.mrb[0].mxu0 %v1019
      %v2398 = vpop.f32.mrb[0].mxu0
      %v2399 = vadd.f32 0.0, %v2398
      %v2400 = vpop.f32.mrb[0].mxu0
      %v2401 = vpop.f32.mrb[0].mxu0
      %v2402 = vadd.f32 0.0, %v2401
      %v2403 = vpop.f32.mrb[0].mxu0
      %2404 = vmatprep.mubr.bf16.mxu0 0
      %2405 = vmatmul.mubr.bf16.gmra.mrb[0].mxu0 %v1022
      %v2406 = vpop.f32.mrb[0].mxu0
      %v2407 = vadd.f32 0.0, %v2406
      %v2408 = vpop.f32.mrb[0].mxu0
      %v2409 = vpop.f32.mrb[0].mxu0
      %v2410 = vadd.f32 0.0, %v2409
      %v2411 = vpop.f32.mrb[0].mxu0
      %2412 = vmatprep.mubr.bf16.mxu0 0
      %2413 = vmatmul.mubr.bf16.gmra.mrb[0].mxu0 %v1025
      %v2414 = vpop.f32.mrb[0].mxu0
      %v2415 = vadd.f32 0.0, %v2414
      %v2416 = vpop.f32.mrb[0].mxu0
      %v2417 = vpop.f32.mrb[0].mxu0
      %v2418 = vadd.f32 0.0, %v2417
      %v2419 = vpop.f32.mrb[0].mxu0
      %2420 = vmatprep.mubr.bf16.mxu0 0
      %2421 = vmatmul.mubr.bf16.gmra.mrb[0].mxu0 %v1648
      %v2422 = vpop.f32.mrb[0].mxu0
      %v2423 = vadd.f32 0.0, %v2422
      %v2424 = vpop.f32.mrb[0].mxu0
      %v2425 = vpop.f32.mrb[0].mxu0
      %v2426 = vadd.f32 0.0, %v2425
      %v2427 = vpop.f32.mrb[0].mxu0
      %2428 = vmatprep.mubr.bf16.mxu0 0
      %2429 = vmatmul.mubr.bf16.gmra.mrb[0].mxu0 %v2271
      %v2430 = vpop.f32.mrb[0].mxu0
      %v2431 = vadd.f32 0.0, %v2430
      %v2432 = vpop.f32.mrb[0].mxu0
      %v2433 = vpop.f32.mrb[0].mxu0
      %v2434 = vadd.f32 0.0, %v2433
      %v2435 = vpop.f32.mrb[0].mxu0
      %2436 = vdwg.mxu0
      %v2437 = vadd.f32 %v2228, %v2311
      %v2438 = vadd.f32 %v2229, %v2314
      %v2439 = vadd.f32 %v2230, %v2319
      %v2440 = vadd.f32 %v2231, %v2322
      %v2441 = vadd.f32 %v2232, %v2327
      %v2442 = vadd.f32 %v2233, %v2330
      %v2443 = vadd.f32 %v2234, %v2335
      %v2444 = vadd.f32 %v2235, %v2338
      %v2445 = vadd.f32 %v2236, %v2343
      %v2446 = vadd.f32 %v2237, %v2346
      %v2447 = vadd.f32 %v2238, %v2351
      %v2448 = vadd.f32 %v2239, %v2354
      %v2449 = vadd.f32 %v2240, %v2359
      %v2450 = vadd.f32 %v2241, %v2362
      %v2451 = vadd.f32 %v2242, %v2367
      %v2452 = vadd.f32 %v2243, %v2370
      %v2453 = vadd.f32 %v2244, %v2375
      %v2454 = vadd.f32 %v2245, %v2378
      %v2455 = vadd.f32 %v2246, %v2383
      %v2456 = vadd.f32 %v2247, %v2386
      %v2457 = vadd.f32 %v2248, %v2391
      %v2458 = vadd.f32 %v2249, %v2394
      %v2459 = vadd.f32 %v2250, %v2399
      %v2460 = vadd.f32 %v2251, %v2402
      %v2461 = vadd.f32 %v2252, %v2407
      %v2462 = vadd.f32 %v2253, %v2410
      %v2463 = vadd.f32 %v2254, %v2415
      %v2464 = vadd.f32 %v2255, %v2418
      %v2465 = vadd.f32 %v2256, %v2423
      %v2466 = vadd.f32 %v2257, %v2426
      %v2467 = vadd.f32 %v2258, %v2431
      %v2468 = vadd.f32 %v2259, %v2434
      %v2469 = vld [vmem:[%s2] sm:$0x1]
      %v2471 = vlaneseq
      %v2472 = vshrl.u32 %v2471, 7
      %v2473 = vsub.s32 0, %v2472
      %v2474 = vrot.slane %v2469, %v2473
      %v2476 = vadd.f32 %v2437, %v2474
      %v2477 = vadd.f32 %v2438, %v2474
      %v2478 = vadd.f32 %v2439, %v2474
      %v2479 = vadd.f32 %v2440, %v2474
      %v2480 = vadd.f32 %v2441, %v2474
      %v2481 = vadd.f32 %v2442, %v2474
      %v2482 = vadd.f32 %v2443, %v2474
      %v2483 = vadd.f32 %v2444, %v2474
      %v2484 = vadd.f32 %v2445, %v2474
      %v2485 = vadd.f32 %v2446, %v2474
      %v2486 = vadd.f32 %v2447, %v2474
      %v2487 = vadd.f32 %v2448, %v2474
      %v2488 = vadd.f32 %v2449, %v2474
      %v2489 = vadd.f32 %v2450, %v2474
      %v2490 = vadd.f32 %v2451, %v2474
      %v2491 = vadd.f32 %v2452, %v2474
      %v2492 = vadd.f32 %v2453, %v2474
      %v2493 = vadd.f32 %v2454, %v2474
      %v2494 = vadd.f32 %v2455, %v2474
      %v2495 = vadd.f32 %v2456, %v2474
      %v2496 = vadd.f32 %v2457, %v2474
      %v2497 = vadd.f32 %v2458, %v2474
      %v2498 = vadd.f32 %v2459, %v2474
      %v2499 = vadd.f32 %v2460, %v2474
      %v2500 = vadd.f32 %v2461, %v2474
      %v2501 = vadd.f32 %v2462, %v2474
      %v2502 = vadd.f32 %v2463, %v2474
      %v2503 = vadd.f32 %v2464, %v2474
      %v2504 = vadd.f32 %v2465, %v2474
      %v2505 = vadd.f32 %v2466, %v2474
      %v2506 = vadd.f32 %v2467, %v2474
      %v2507 = vadd.f32 %v2468, %v2474
      %v2508 = vxor.u32 %v2476, 2147483648
      %v2509 = vxor.u32 %v2477, 2147483648
      %v2510 = vxor.u32 %v2478, 2147483648
      %v2511 = vxor.u32 %v2479, 2147483648
      %v2512 = vxor.u32 %v2480, 2147483648
      %v2513 = vxor.u32 %v2481, 2147483648
      %v2514 = vxor.u32 %v2482, 2147483648
      %v2515 = vxor.u32 %v2483, 2147483648
      %v2516 = vxor.u32 %v2484, 2147483648
      %v2517 = vxor.u32 %v2485, 2147483648
      %v2518 = vxor.u32 %v2486, 2147483648
      %v2519 = vxor.u32 %v2487, 2147483648
      %v2520 = vxor.u32 %v2488, 2147483648
      %v2521 = vxor.u32 %v2489, 2147483648
      %v2522 = vxor.u32 %v2490, 2147483648
      %v2523 = vxor.u32 %v2491, 2147483648
      %v2524 = vxor.u32 %v2492, 2147483648
      %v2525 = vxor.u32 %v2493, 2147483648
      %v2526 = vxor.u32 %v2494, 2147483648
      %v2527 = vxor.u32 %v2495, 2147483648
      %v2528 = vxor.u32 %v2496, 2147483648
      %v2529 = vxor.u32 %v2497, 2147483648
      %v2530 = vxor.u32 %v2498, 2147483648
      %v2531 = vxor.u32 %v2499, 2147483648
      %v2532 = vxor.u32 %v2500, 2147483648
      %v2533 = vxor.u32 %v2501, 2147483648
      %v2534 = vxor.u32 %v2502, 2147483648
      %v2535 = vxor.u32 %v2503, 2147483648
      %v2536 = vxor.u32 %v2504, 2147483648
      %v2537 = vxor.u32 %v2505, 2147483648
      %v2538 = vxor.u32 %v2506, 2147483648
      %v2539 = vxor.u32 %v2507, 2147483648
      %v2540 = vmul.f32 %v2508, 1.442695
      %v2541 = vpow.pop %v2540
      %v2542 = vmul.f32 %v2509, 1.442695
      %v2543 = vpow.pop %v2542
      %v2544 = vmul.f32 %v2510, 1.442695
      %v2545 = vpow.pop %v2544
      %v2546 = vmul.f32 %v2511, 1.442695
      %v2547 = vpow.pop %v2546
      %v2548 = vmul.f32 %v2512, 1.442695
      %v2549 = vpow.pop %v2548
      %v2550 = vmul.f32 %v2513, 1.442695
      %v2551 = vpow.pop %v2550
      %v2552 = vmul.f32 %v2514, 1.442695
      %v2553 = vpow.pop %v2552
      %v2554 = vmul.f32 %v2515, 1.442695
      %v2555 = vpow.pop %v2554
      %v2556 = vmul.f32 %v2516, 1.442695
      %v2557 = vpow.pop %v2556
      %v2558 = vmul.f32 %v2517, 1.442695
      %v2559 = vpow.pop %v2558
      %v2560 = vmul.f32 %v2518, 1.442695
      %v2561 = vpow.pop %v2560
      %v2562 = vmul.f32 %v2519, 1.442695
      %v2563 = vpow.pop %v2562
      %v2564 = vmul.f32 %v2520, 1.442695
      %v2565 = vpow.pop %v2564
      %v2566 = vmul.f32 %v2521, 1.442695
      %v2567 = vpow.pop %v2566
      %v2568 = vmul.f32 %v2522, 1.442695
      %v2569 = vpow.pop %v2568
      %v2570 = vmul.f32 %v2523, 1.442695
      %v2571 = vpow.pop %v2570
      %v2572 = vmul.f32 %v2524, 1.442695
      %v2573 = vpow.pop %v2572
      %v2574 = vmul.f32 %v2525, 1.442695
      %v2575 = vpow.pop %v2574
      %v2576 = vmul.f32 %v2526, 1.442695
      %v2577 = vpow.pop %v2576
      %v2578 = vmul.f32 %v2527, 1.442695
      %v2579 = vpow.pop %v2578
      %v2580 = vmul.f32 %v2528, 1.442695
      %v2581 = vpow.pop %v2580
      %v2582 = vmul.f32 %v2529, 1.442695
      %v2583 = vpow.pop %v2582
      %v2584 = vmul.f32 %v2530, 1.442695
      %v2585 = vpow.pop %v2584
      %v2586 = vmul.f32 %v2531, 1.442695
      %v2587 = vpow.pop %v2586
      %v2588 = vmul.f32 %v2532, 1.442695
      %v2589 = vpow.pop %v2588
      %v2590 = vmul.f32 %v2533, 1.442695
      %v2591 = vpow.pop %v2590
      %v2592 = vmul.f32 %v2534, 1.442695
      %v2593 = vpow.pop %v2592
      %v2594 = vmul.f32 %v2535, 1.442695
      %v2595 = vpow.pop %v2594
      %v2596 = vmul.f32 %v2536, 1.442695
      %v2597 = vpow.pop %v2596
      %v2598 = vmul.f32 %v2537, 1.442695
      %v2599 = vpow.pop %v2598
      %v2600 = vmul.f32 %v2538, 1.442695
      %v2601 = vpow.pop %v2600
      %v2602 = vmul.f32 %v2539, 1.442695
      %v2603 = vpow.pop %v2602
      %v2604 = vadd.f32 %v2541, 1.0
      %v2605 = vadd.f32 %v2543, 1.0
      %v2606 = vadd.f32 %v2545, 1.0
      %v2607 = vadd.f32 %v2547, 1.0
      %v2608 = vadd.f32 %v2549, 1.0
      %v2609 = vadd.f32 %v2551, 1.0
      %v2610 = vadd.f32 %v2553, 1.0
      %v2611 = vadd.f32 %v2555, 1.0
      %v2612 = vadd.f32 %v2557, 1.0
      %v2613 = vadd.f32 %v2559, 1.0
      %v2614 = vadd.f32 %v2561, 1.0
      %v2615 = vadd.f32 %v2563, 1.0
      %v2616 = vadd.f32 %v2565, 1.0
      %v2617 = vadd.f32 %v2567, 1.0
      %v2618 = vadd.f32 %v2569, 1.0
      %v2619 = vadd.f32 %v2571, 1.0
      %v2620 = vadd.f32 %v2573, 1.0
      %v2621 = vadd.f32 %v2575, 1.0
      %v2622 = vadd.f32 %v2577, 1.0
      %v2623 = vadd.f32 %v2579, 1.0
      %v2624 = vadd.f32 %v2581, 1.0
      %v2625 = vadd.f32 %v2583, 1.0
      %v2626 = vadd.f32 %v2585, 1.0
      %v2627 = vadd.f32 %v2587, 1.0
      %v2628 = vadd.f32 %v2589, 1.0
      %v2629 = vadd.f32 %v2591, 1.0
      %v2630 = vadd.f32 %v2593, 1.0
      %v2631 = vadd.f32 %v2595, 1.0
      %v2632 = vadd.f32 %v2597, 1.0
      %v2633 = vadd.f32 %v2599, 1.0
      %v2634 = vadd.f32 %v2601, 1.0
      %v2635 = vadd.f32 %v2603, 1.0
      %v2636 = vrcp.pop %v2604
      %v2637 = vmul.f32 1.0, %v2636
      %v2638 = vrcp.pop %v2605
      %v2639 = vmul.f32 1.0, %v2638
      %v2640 = vrcp.pop %v2606
      %v2641 = vmul.f32 1.0, %v2640
      %v2642 = vrcp.pop %v2607
      %v2643 = vmul.f32 1.0, %v2642
      %v2644 = vrcp.pop %v2608
      %v2645 = vmul.f32 1.0, %v2644
      %v2646 = vrcp.pop %v2609
      %v2647 = vmul.f32 1.0, %v2646
      %v2648 = vrcp.pop %v2610
      %v2649 = vmul.f32 1.0, %v2648
      %v2650 = vrcp.pop %v2611
      %v2651 = vmul.f32 1.0, %v2650
      %v2652 = vrcp.pop %v2612
      %v2653 = vmul.f32 1.0, %v2652
      %v2654 = vrcp.pop %v2613
      %v2655 = vmul.f32 1.0, %v2654
      %v2656 = vrcp.pop %v2614
      %v2657 = vmul.f32 1.0, %v2656
      %v2658 = vrcp.pop %v2615
      %v2659 = vmul.f32 1.0, %v2658
      %v2660 = vrcp.pop %v2616
      %v2661 = vmul.f32 1.0, %v2660
      %v2662 = vrcp.pop %v2617
      %v2663 = vmul.f32 1.0, %v2662
      %v2664 = vrcp.pop %v2618
      %v2665 = vmul.f32 1.0, %v2664
      %v2666 = vrcp.pop %v2619
      %v2667 = vmul.f32 1.0, %v2666
      %v2668 = vrcp.pop %v2620
      %v2669 = vmul.f32 1.0, %v2668
      %v2670 = vrcp.pop %v2621
      %v2671 = vmul.f32 1.0, %v2670
      %v2672 = vrcp.pop %v2622
      %v2673 = vmul.f32 1.0, %v2672
      %v2674 = vrcp.pop %v2623
      %v2675 = vmul.f32 1.0, %v2674
      %v2676 = vrcp.pop %v2624
      %v2677 = vmul.f32 1.0, %v2676
      %v2678 = vrcp.pop %v2625
      %v2679 = vmul.f32 1.0, %v2678
      %v2680 = vrcp.pop %v2626
      %v2681 = vmul.f32 1.0, %v2680
      %v2682 = vrcp.pop %v2627
      %v2683 = vmul.f32 1.0, %v2682
      %v2684 = vrcp.pop %v2628
      %v2685 = vmul.f32 1.0, %v2684
      %v2686 = vrcp.pop %v2629
      %v2687 = vmul.f32 1.0, %v2686
      %v2688 = vrcp.pop %v2630
      %v2689 = vmul.f32 1.0, %v2688
      %v2690 = vrcp.pop %v2631
      %v2691 = vmul.f32 1.0, %v2690
      %v2692 = vrcp.pop %v2632
      %v2693 = vmul.f32 1.0, %v2692
      %v2694 = vrcp.pop %v2633
      %v2695 = vmul.f32 1.0, %v2694
      %v2696 = vrcp.pop %v2634
      %v2697 = vmul.f32 1.0, %v2696
      %v2698 = vrcp.pop %v2635
      %v2699 = vmul.f32 1.0, %v2698
      %v2700 = vmul.f32 %v2476, %v2637
      %v2701 = vmul.f32 %v2477, %v2639
      %v2702 = vmul.f32 %v2478, %v2641
      %v2703 = vmul.f32 %v2479, %v2643
      %v2704 = vmul.f32 %v2480, %v2645
      %v2705 = vmul.f32 %v2481, %v2647
      %v2706 = vmul.f32 %v2482, %v2649
      %v2707 = vmul.f32 %v2483, %v2651
      %v2708 = vmul.f32 %v2484, %v2653
      %v2709 = vmul.f32 %v2485, %v2655
      %v2710 = vmul.f32 %v2486, %v2657
      %v2711 = vmul.f32 %v2487, %v2659
      %v2712 = vmul.f32 %v2488, %v2661
      %v2713 = vmul.f32 %v2489, %v2663
      %v2714 = vmul.f32 %v2490, %v2665
      %v2715 = vmul.f32 %v2491, %v2667
      %v2716 = vmul.f32 %v2492, %v2669
      %v2717 = vmul.f32 %v2493, %v2671
      %v2718 = vmul.f32 %v2494, %v2673
      %v2719 = vmul.f32 %v2495, %v2675
      %v2720 = vmul.f32 %v2496, %v2677
      %v2721 = vmul.f32 %v2497, %v2679
      %v2722 = vmul.f32 %v2498, %v2681
      %v2723 = vmul.f32 %v2499, %v2683
      %v2724 = vmul.f32 %v2500, %v2685
      %v2725 = vmul.f32 %v2501, %v2687
      %v2726 = vmul.f32 %v2502, %v2689
      %v2727 = vmul.f32 %v2503, %v2691
      %v2728 = vmul.f32 %v2504, %v2693
      %v2729 = vmul.f32 %v2505, %v2695
      %v2730 = vmul.f32 %v2506, %v2697
      %v2731 = vmul.f32 %v2507, %v2699
      %2732 = vst.msk [vmem:[%s170] sm:$0xff] %vm422, %v2700
      %2733 = vst.msk [vmem:[%s170 + $0x8] sm:$0xff] %vm422, %v2701
      %2734 = vst.msk [vmem:[%s170 + $0x10] sm:$0xff] %vm422, %v2702
      %2735 = vst.msk [vmem:[%s170 + $0x18] sm:$0xff] %vm422, %v2703
      %2736 = vst.msk [vmem:[%s170 + $0x20] sm:$0xff] %vm422, %v2704
      %2737 = vst.msk [vmem:[%s170 + $0x28] sm:$0xff] %vm422, %v2705
      %2738 = vst.msk [vmem:[%s170 + $0x30] sm:$0xff] %vm422, %v2706
      %2739 = vst.msk [vmem:[%s170 + $0x38] sm:$0xff] %vm422, %v2707
      %2740 = vst.msk [vmem:[%s170 + $0x40] sm:$0xff] %vm422, %v2708
      %2741 = vst.msk [vmem:[%s170 + $0x48] sm:$0xff] %vm422, %v2709
      %2742 = vst.msk [vmem:[%s170 + $0x50] sm:$0xff] %vm422, %v2710
      %2743 = vst.msk [vmem:[%s170 + $0x58] sm:$0xff] %vm422, %v2711
      %2744 = vst.msk [vmem:[%s170 + $0x60] sm:$0xff] %vm422, %v2712
      %2745 = vst.msk [vmem:[%s170 + $0x68] sm:$0xff] %vm422, %v2713
      %2746 = vst.msk [vmem:[%s170 + $0x70] sm:$0xff] %vm422, %v2714
      %2747 = vst.msk [vmem:[%s170 + $0x78] sm:$0xff] %vm422, %v2715
      %2748 = vst.msk [vmem:[%s170 + $0x80] sm:$0xff] %vm422, %v2716
      %2749 = vst.msk [vmem:[%s170 + $0x88] sm:$0xff] %vm422, %v2717
      %2750 = vst.msk [vmem:[%s170 + $0x90] sm:$0xff] %vm422, %v2718
      %2751 = vst.msk [vmem:[%s170 + $0x98] sm:$0xff] %vm422, %v2719
      %2752 = vst.msk [vmem:[%s170 + $0xa0] sm:$0xff] %vm422, %v2720
      %2753 = vst.msk [vmem:[%s170 + $0xa8] sm:$0xff] %vm422, %v2721
      %2754 = vst.msk [vmem:[%s170 + $0xb0] sm:$0xff] %vm422, %v2722
      %2755 = vst.msk [vmem:[%s170 + $0xb8] sm:$0xff] %vm422, %v2723
      %2756 = vst.msk [vmem:[%s170 + $0xc0] sm:$0xff] %vm422, %v2724
      %2757 = vst.msk [vmem:[%s170 + $0xc8] sm:$0xff] %vm422, %v2725
      %2758 = vst.msk [vmem:[%s170 + $0xd0] sm:$0xff] %vm422, %v2726
      %2759 = vst.msk [vmem:[%s170 + $0xd8] sm:$0xff] %vm422, %v2727
      %2760 = vst.msk [vmem:[%s170 + $0xe0] sm:$0xff] %vm422, %v2728
      %2761 = vst.msk [vmem:[%s170 + $0xe8] sm:$0xff] %vm422, %v2729
      %2762 = vst.msk [vmem:[%s170 + $0xf0] sm:$0xff] %vm422, %v2730
      %2763 = vst.msk [vmem:[%s170 + $0xf8] sm:$0xff] %vm422, %v2731
      %p2764 = scmp.lt.s32.totalorder %s14, 1
      %s2765 = scalar_select %p2764, %s14, 1
      %s2766 = smul.addr %s2765, 32
      %s2767 = smul.addr %s2766, 8
      %s2768 = scalar_lea.vmem %s3, %s2767
      // Predicated region
      $region33: #{tpu_custom_call.1} parent=31 // pred_check
        %p2769 = pneg %p100
      $region34: #{tpu_custom_call.1} parent=31 // pred_check_branch
        %2771 = sbr.rel (%p2769) target = $region36
      $region35: #{tpu_custom_call.1} parent=31 // pred_region
        _
      $region36: #{tpu_custom_call.1} parent=31 // pred_fallthru
        _
    $region32: #{tpu_custom_call.1} parent=5 // pred_fallthru
      _
    %p2772 = scmp.le.s32.totalorder 2, %s9
    // Predicated region
    $region37: #{tpu_custom_call.1} parent=5 // pred_check
      %p2773 = pneg %p2772
    $region38: #{tpu_custom_call.1} parent=5 // pred_check_branch
      %2775 = sbr.rel (%p2773) target = $region40
    $region39: #{tpu_custom_call.1} parent=5 // pred_region
      %s2776 = ssub.s32 %s9, 2
      // Predicated region
      $region41: #{tpu_custom_call.1} parent=39 // pred_check
        %p2777 = pneg %p106
      $region42: #{tpu_custom_call.1} parent=39 // pred_check_branch
        %2779 = sbr.rel (%p2777) target = $region44
      $region43: #{tpu_custom_call.1} parent=39 // pred_region
        %p2780 = scmp.lt.s32.totalorder %s15, 1
        %s2781 = scalar_select %p2780, %s15, 1
        %s2782 = smul.addr %s2781, 32
        %s2783 = smul.addr %s2782, 8
        %s2784 = scalar_lea.vmem %s3, %s2783
      $region44: #{tpu_custom_call.1} parent=39 // pred_fallthru
        _
    $region40: #{tpu_custom_call.1} parent=5 // pred_fallthru
      _
  $region6: #{tpu_custom_call.1} parent=0 // loop_footer
    %s13 = sadd.s32 1, %s9
  $region7: #{tpu_custom_call.1} parent=0 // loop_footer_branch
    %8 = sbr.rel target = $region3
  $region8: #{tpu_custom_call.1} parent=0 // loop_exit
    _

</llo_original>
